<compile_context>
chip_gen: v7x
topology: tpu7x:2x2x1
jax: 0.10.0
libtpu: 0.0.40
codegen_flags: <defaults>
</compile_context>

<pallas_src>
import math

import jax
import jax.numpy as jnp
import numpy as np
from jax.experimental import pallas as pl
from jax.experimental.pallas import tpu as pltpu


def _largest_divisor(n: int, cap: int) -> int:
    cap = int(max(1, min(n, cap)))
    while n % cap:
        cap -= 1
    return cap


def _make_kernel(head_dim: int, hidden: int, seq_len: int, model_dim: int,
                 bt: int, nh: int):
    rows = bt * seq_len

    def kernel(x_ref, w_in_ref, b_in_ref, attn_w_ref, w_out_ref, b_out_ref,
               out_ref, aw1_ref, acc_ref):
        # x_ref:      (Bt, S, D)               bf16 (resident across head groups)
        # w_in_ref:   (1, D, Nh*Hd)            bf16
        # b_in_ref:   (1, 1, Nh*Hd)            f32
        # attn_w_ref: (Nh, Hd, Hd*hidden)      bf16 (scale pre-folded)
        # w_out_ref:  (1, Nh*Hd, D)            bf16
        # b_out_ref:  (1, D)                   f32
        # out_ref:    (Bt, S, D)               f32  (written at the last group)
        # aw1_ref:    (Bt, Nh, S, hidden)      f32
        # acc_ref:    (Bt*S, D)                f32 scratch accumulated across groups
        g = pl.program_id(1)

        @pl.when(g == 0)
        def _():
            acc_ref[...] = jnp.zeros_like(acc_ref)

        # --- grouped in_project: (Bt*S, D) @ (D, Nh*Hd), MXU bf16 / f32 acc ----
        x2 = x_ref[...].reshape(rows, model_dim)
        xh_all = jnp.dot(x2, w_in_ref[0],
                         preferred_element_type=jnp.float32) + b_in_ref[0]  # (Bt*S, Nh*Hd)

        head_outs = []
        for h in range(nh):  # static unroll over the heads of this group
            xh = xh_all[:, h * head_dim:(h + 1) * head_dim]                 # (Bt*S, Hd)

            # softmax over head_dim (f32, EUP reciprocal)
            xh = jnp.exp(xh - jnp.max(xh, axis=-1, keepdims=True))
            xh = xh * pl.reciprocal(jnp.sum(xh, axis=-1, keepdims=True), approx=True)
            xh3 = xh.reshape(bt, seq_len, head_dim)                         # (Bt, S, Hd)
            xh3_b = xh3.astype(jnp.bfloat16)

            # --- einsum('bse,oneh,brh->bso') with r summed out ------------------
            #   y[b,h']     = sum_r xh3[b,r,h']
            #   zT[b,e,o]   = sum_h' W[o,n,e,h'] * y[b,h']   (scale already folded)
            #   aw[b,s,o]   = sum_e xh3[b,s,e] * zT[b,e,o]
            y = jnp.sum(xh3, axis=1).astype(jnp.bfloat16)                   # (Bt, Hd)
            z = jnp.dot(y, attn_w_ref[h],
                        preferred_element_type=jnp.float32)                 # (Bt, Hd*O)
            zT = z.reshape(bt, head_dim, hidden).astype(jnp.bfloat16)       # (Bt, Hd, O)
            aw = jnp.einsum('bse,beo->bso', xh3_b, zT,
                            preferred_element_type=jnp.float32)             # (Bt, S, O)

            # softmax over hidden (f32, exact divide — aw1 is a user-visible output)
            aw = jnp.exp(aw - jnp.max(aw, axis=-1, keepdims=True))
            aw1 = aw / jnp.sum(aw, axis=-1, keepdims=True)
            aw1_ref[:, h, :, :] = aw1.astype(aw1_ref.dtype)

            # attn_dropout is the identity in eval mode.
            # per-head attention output: (S, hidden) @ (hidden == S, Hd)
            ho = jnp.einsum('bso,boe->bse', aw1.astype(jnp.bfloat16), xh3_b,
                            preferred_element_type=jnp.float32)             # (Bt, S, Hd)
            head_outs.append(ho.reshape(rows, head_dim).astype(jnp.bfloat16))

        # --- grouped out_project: (Bt*S, Nh*Hd) @ (Nh*Hd, D), acc across groups --
        ho_all = head_outs[0] if nh == 1 else jnp.concatenate(head_outs, axis=-1)
        acc_ref[...] += jnp.dot(ho_all, w_out_ref[0],
                                preferred_element_type=jnp.float32)

        @pl.when(g == pl.num_programs(1) - 1)
        def _():
            out_ref[...] = (acc_ref[...] + b_out_ref[...]).reshape(
                bt, seq_len, model_dim).astype(out_ref.dtype)

    return kernel


def linear_fitting_forward(x, w_in, b_in, attn_weight, w_out, b_out, num_heads,
                           *, batch_block=None, head_group=None):
    """Pallas forward of Linear_Fitting (eval mode).

    x: (B, S, D) f32; w_in/w_out: (D, D) in PyTorch (out, in) layout;
    b_in/b_out: (D,); attn_weight: (hidden_feature, N, Hd, Hd).
    Returns (attn_outputs (B, S, D) f32, attn_weights_1 (B, N, S, hidden) f32).
    """
    B, S, D = x.shape
    head_dim = D // num_heads
    hidden = attn_weight.shape[0]
    assert head_dim * num_heads == D, "model_dim should be divisible by num_heads"
    assert hidden == S, "torch.matmul(attn_weights, x) requires hidden_feature == seq_len"

    f32, bf16 = jnp.float32, jnp.bfloat16
    scale = 1.0 / (head_dim * math.sqrt(S))

    # --- choose head-group (Nh) and batch-block (Bt) sizes -----------------------
    if head_group is None:
        mxu_cap = max(1, 256 // head_dim)  # fill the 256-wide MXU on v6e/v7x
        # keep the attn-weight block <= 8 MiB per buffer so double-buffering stays
        # well inside v7x's 64 MiB VMEM (review items 1 & 2).
        vmem_cap = max(1, (8 << 20) // max(1, head_dim * head_dim * hidden * 2))
        head_group = _largest_divisor(num_heads, min(num_heads, mxu_cap, vmem_cap))
    nh = int(head_group)
    assert num_heads % nh == 0

    if batch_block is None:
        # cap x (bf16) + acc (f32) + out (f32) residency per step to ~8 MiB.
        batch_block = _largest_divisor(B, max(1, (8 << 20) // max(1, S * D * 10)))
    bt = int(batch_block)
    assert B % bt == 0
    G = num_heads // nh

    # --- host-side layout prep (XLA side, outside the kernel) --------------------
    x_b = x.astype(bf16)
    # in_project: x @ W^T form, columns grouped per head group -> (G, D, Nh*Hd)
    w_in_g = jnp.transpose(jnp.transpose(w_in).reshape(D, G, nh * head_dim),
                           (1, 0, 2)).astype(bf16)
    b_in_g = b_in.reshape(G, 1, nh * head_dim).astype(f32)
    # out_project: rows (input channels, head-ordered) grouped -> (G, Nh*Hd, D)
    w_out_g = jnp.transpose(w_out).reshape(G, nh * head_dim, D).astype(bf16)
    b_out_r = b_out.reshape(1, D).astype(f32)
    # attn_weight (O, N, e, h): fold the scale in f32, then (N, h, e, O) -> (N, h, e*O)
    attn_w2 = jnp.transpose(attn_weight.astype(f32) * scale, (1, 3, 2, 0)).reshape(
        num_heads, head_dim, head_dim * hidden).astype(bf16)

    # --- VMEM budget: double-buffered blocks + scratch, capped v7x-safe ----------
    in_blk = (bt * S * D * 2 + D * nh * head_dim * 2 + nh * head_dim * 4
              + nh * head_dim * head_dim * hidden * 2 + nh * head_dim * D * 2 + D * 4)
    out_blk = bt * S * D * 4 + bt * nh * S * hidden * 4
    scratch_bytes = bt * S * D * 4
    need = 2 * (in_blk + out_blk) + scratch_bytes
    # 48 MiB leaves headroom on v7x's 64 MiB physical VMEM; raise only on 128 MiB chips.
    vmem_limit = int(min(max(need + (8 << 20), 32 << 20), 48 << 20))

    kernel = _make_kernel(head_dim, hidden, S, D, bt, nh)
    out_shape = (
        jax.ShapeDtypeStruct((B, S, D), jnp.float32),
        jax.ShapeDtypeStruct((B, num_heads, S, hidden), jnp.float32),
    )

    return pl.pallas_call(
        kernel,
        out_shape=out_shape,
        grid_spec=pltpu.PrefetchScalarGridSpec(
            num_scalar_prefetch=0,
            grid=(B // bt, G),
            in_specs=[
                pl.BlockSpec((bt, S, D), lambda b, g: (b, 0, 0)),
                pl.BlockSpec((1, D, nh * head_dim), lambda b, g: (g, 0, 0)),
                pl.BlockSpec((1, 1, nh * head_dim), lambda b, g: (g, 0, 0)),
                pl.BlockSpec((nh, head_dim, head_dim * hidden), lambda b, g: (g, 0, 0)),
                pl.BlockSpec((1, nh * head_dim, D), lambda b, g: (g, 0, 0)),
                pl.BlockSpec((1, D), lambda b, g: (0, 0)),
            ],
            out_specs=(
                pl.BlockSpec((bt, S, D), lambda b, g: (b, 0, 0)),
                pl.BlockSpec((bt, nh, S, hidden), lambda b, g: (b, g, 0, 0)),
            ),
            scratch_shapes=[pltpu.VMEM((bt * S, D), jnp.float32)],
        ),
        compiler_params=pltpu.CompilerParams(
            dimension_semantics=("parallel", "arbitrary"),
            vmem_limit_bytes=vmem_limit,
        ),
    )(x_b, w_in_g, b_in_g, attn_w2, w_out_g, b_out_r)


def reference_forward(x, w_in, b_in, attn_weight, w_out, b_out, num_heads):
    """Pure-JAX (f32) mirror of the PyTorch forward (eval mode)."""
    B, S, D = x.shape
    head_dim = D // num_heads
    xp = x @ w_in.T + b_in
    xp = xp.reshape(B, S, num_heads, head_dim).transpose(0, 2, 1, 3)          # (B,N,S,Hd)
    xs = jax.nn.softmax(xp, axis=-1)
    aw = jnp.einsum('bnse,oneh,bnrh->bnso', xs, attn_weight, xs) / (head_dim * math.sqrt(S))
    aw1 = jax.nn.softmax(aw, axis=-1)
    out = jnp.matmul(aw1, xs)                                                 # requires O == S
    out = out.transpose(0, 2, 1, 3).reshape(B, S, D)
    out = out @ w_out.T + b_out
    return out, aw1


if __name__ == "__main__":
    # Small shapes consistent with the module: hidden_feature must equal seq_len.
    B, S, D = 2, 16, 32
    num_heads = 4
    head_dim = D // num_heads
    hidden_feature = S

    key = jax.random.PRNGKey(0)
    k_x, k_aw, k_wi, k_bi, k_wo, k_bo = jax.random.split(key, 6)

    x = jax.random.normal(k_x, (B, S, D), dtype=jnp.float32)

    # attn_weight: kaiming_uniform_ (a=0) -> bound = sqrt(6 / fan_in),
    # fan_in = num_heads * head_dim * head_dim for a 4-D tensor.
    fan_in_attn = num_heads * head_dim * head_dim
    bound_attn = math.sqrt(6.0 / fan_in_attn)
    attn_weight = jax.random.uniform(
        k_aw, (hidden_feature, num_heads, head_dim, head_dim),
        minval=-bound_attn, maxval=bound_attn, dtype=jnp.float32)

    # nn.Linear default init: weight ~ U(-1/sqrt(fan_in), 1/sqrt(fan_in)), same for bias.
    bound_lin = 1.0 / math.sqrt(D)
    w_in = jax.random.uniform(k_wi, (D, D), minval=-bound_lin, maxval=bound_lin,
                              dtype=jnp.float32)
    b_in = jax.random.uniform(k_bi, (D,), minval=-bound_lin, maxval=bound_lin,
                              dtype=jnp.float32)
    w_out = jax.random.uniform(k_wo, (D, D), minval=-bound_lin, maxval=bound_lin,
                               dtype=jnp.float32)
    b_out = jax.random.uniform(k_bo, (D,), minval=-bound_lin, maxval=bound_lin,
                               dtype=jnp.float32)

    ref_out, ref_aw1 = reference_forward(x, w_in, b_in, attn_weight, w_out, b_out, num_heads)

    # Tolerances account for bf16 matmul operands (f32 accumulation) and the
    # approximate EUP reciprocal in the first softmax normalization.
    def check(out, aw1):
        np.testing.assert_allclose(np.asarray(out), np.asarray(ref_out), rtol=3e-2, atol=3e-2)
        np.testing.assert_allclose(np.asarray(aw1), np.asarray(ref_aw1), rtol=3e-2, atol=3e-2)
        assert out.shape == (B, S, D)
        assert aw1.shape == (B, num_heads, S, hidden_feature)

    # 1) default tiling: at these small sizes all heads/batches collapse into a
    #    single grid step (per-step overhead dominates tiny tiles — review item 8).
    out, aw1 = linear_fitting_forward(x, w_in, b_in, attn_weight, w_out, b_out, num_heads)
    out = jax.block_until_ready(out)
    aw1 = jax.block_until_ready(aw1)
    check(out, aw1)

    # 2) forced (Bt=1, Nh=2) tiling: exercises the pipelined (batch, head-group)
    #    grid and the cross-group accumulator path used at realistic sizes.
    out2, aw1_2 = linear_fitting_forward(x, w_in, b_in, attn_weight, w_out, b_out,
                                         num_heads, batch_block=1, head_group=2)
    out2 = jax.block_until_ready(out2)
    aw1_2 = jax.block_until_ready(aw1_2)
    check(out2, aw1_2)

    print("KERNEL_OK")
</pallas_src>

<mosaic_0001>
module attributes {stable_mosaic.version = 11 : i64} {
  func.func @kernel(%arg0: i32, %arg1: i32, %arg2: memref<2x16x32xbf16, #tpu.memory_space<vmem>>, %arg3: memref<1x32x32xbf16, #tpu.memory_space<vmem>>, %arg4: memref<1x1x32xf32, #tpu.memory_space<vmem>>, %arg5: memref<4x8x128xbf16, #tpu.memory_space<vmem>>, %arg6: memref<1x32x32xbf16, #tpu.memory_space<vmem>>, %arg7: memref<1x32xf32, #tpu.memory_space<vmem>>, %arg8: memref<2x16x32xf32, #tpu.memory_space<vmem>>, %arg9: memref<2x4x16x16xf32, #tpu.memory_space<vmem>>, %arg10: memref<32x32xf32, #tpu.memory_space<vmem>>) attributes {dimension_semantics = [#tpu.dimension_semantics<parallel>, #tpu.dimension_semantics<arbitrary>], iteration_bounds = array<i64: 1, 1>, scalar_prefetch = 0 : i64, scratch_operands = 1 : i64, tpu.core_type = #tpu.core_type<tc>, window_params = [{transform_indices = @transform_0, window_bounds = array<i64: 2, 16, 32>}, {transform_indices = @transform_1, window_bounds = array<i64: 1, 32, 32>}, {transform_indices = @transform_2, window_bounds = array<i64: 1, 1, 32>}, {transform_indices = @transform_3, window_bounds = array<i64: 4, 8, 128>}, {transform_indices = @transform_4, window_bounds = array<i64: 1, 32, 32>}, {pipeline_mode = #tpu.pipeline_mode<synchronous>, transform_indices = @transform_5, window_bounds = array<i64: 1, 32>}, {transform_indices = @transform_6, window_bounds = array<i64: 2, 16, 32>}, {transform_indices = @transform_7, window_bounds = array<i64: 2, 4, 16, 16>}]} {
    %c0_i32 = arith.constant 0 : i32
    %0 = arith.cmpi eq, %arg1, %c0_i32 : i32
    %1 = arith.extui %0 : i1 to i32
    %c0_i32_0 = arith.constant 0 : i32
    %2 = arith.cmpi ne, %1, %c0_i32_0 : i32
    scf.if %2 {
      %cst_76 = arith.constant 0.000000e+00 : f32
      %170 = vector.broadcast %cst_76 : f32 to vector<32x32xf32>
      %c0_77 = arith.constant 0 : index
      %c0_78 = arith.constant 0 : index
      %171 = vector.load %arg10[%c0_77, %c0_78] : memref<32x32xf32, #tpu.memory_space<vmem>>, vector<32x32xf32>
      tpu.vector_store %arg10[%c0_77, %c0_78], %170 {strides = array<i32>} : memref<32x32xf32, #tpu.memory_space<vmem>>, vector<32x32xf32>,
    } else {
    }
    %c0 = arith.constant 0 : index
    %c0_1 = arith.constant 0 : index
    %c0_2 = arith.constant 0 : index
    %3 = vector.load %arg2[%c0, %c0_1, %c0_2] : memref<2x16x32xbf16, #tpu.memory_space<vmem>>, vector<2x16x32xbf16>
    %4 = vector.shape_cast %3 : vector<2x16x32xbf16> to vector<32x32xbf16>
    %c0_3 = arith.constant 0 : index
    %c0_4 = arith.constant 0 : index
    %c0_5 = arith.constant 0 : index
    %5 = vector.load %arg3[%c0_3, %c0_4, %c0_5] : memref<1x32x32xbf16, #tpu.memory_space<vmem>>, vector<1x32x32xbf16>
    %6 = vector.shape_cast %5 : vector<1x32x32xbf16> to vector<32x32xbf16>
    %cst = arith.constant dense<0.000000e+00> : vector<32x32xf32>
    %7 = tpu.matmul %4, %6, %cst {dimension_numbers = #tpu.dot_dimension_numbers<[1], [0], [0], [1], [0, 0, 1, 1], [], []>} : vector<32x32xbf16>, vector<32x32xbf16>, vector<32x32xf32> -> vector<32x32xf32>
    %c0_6 = arith.constant 0 : index
    %c0_7 = arith.constant 0 : index
    %c0_8 = arith.constant 0 : index
    %8 = vector.load %arg4[%c0_6, %c0_7, %c0_8] : memref<1x1x32xf32, #tpu.memory_space<vmem>>, vector<1x1x32xf32>
    %9 = vector.shape_cast %8 : vector<1x1x32xf32> to vector<1x32xf32>
    %10 = vector.broadcast %9 : vector<1x32xf32> to vector<32x32xf32>
    %11 = arith.addf %7, %10 : vector<32x32xf32>
    %12 = vector.extract_strided_slice %11 {offsets = [0, 0], sizes = [32, 8], strides = [1, 1]} : vector<32x32xf32> to vector<32x8xf32>
    %cst_9 = arith.constant dense<0xFF800000> : vector<32xf32>
    %13 = vector.multi_reduction <maximumf>, %12, %cst_9 [1] : vector<32x8xf32> to vector<32xf32>
    %14 = vector.shape_cast %13 : vector<32xf32> to vector<32x1xf32>
    %15 = vector.broadcast %14 : vector<32x1xf32> to vector<32x8xf32>
    %16 = arith.subf %12, %15 : vector<32x8xf32>
    %17 = math.exp %16 : vector<32x8xf32>
    %cst_10 = arith.constant dense<0.000000e+00> : vector<32xf32>
    %18 = vector.multi_reduction <add>, %17, %cst_10 [1] : vector<32x8xf32> to vector<32xf32>
    %19 = vector.shape_cast %18 : vector<32xf32> to vector<32x1xf32>
    %20 = tpu.reciprocal %19 {approx = true} : vector<32x1xf32> -> vector<32x1xf32>
    %21 = vector.broadcast %20 : vector<32x1xf32> to vector<32x8xf32>
    %22 = arith.mulf %17, %21 : vector<32x8xf32>
    %23 = vector.shape_cast %22 : vector<32x8xf32> to vector<2x16x8xf32>
    %24 = arith.truncf %23 : vector<2x16x8xf32> to vector<2x16x8xbf16>
    %cst_11 = arith.constant dense<0.000000e+00> : vector<2x8xf32>
    %25 = vector.multi_reduction <add>, %23, %cst_11 [1] : vector<2x16x8xf32> to vector<2x8xf32>
    %26 = arith.truncf %25 : vector<2x8xf32> to vector<2x8xbf16>
    %c0_12 = arith.constant 0 : index
    %c0_13 = arith.constant 0 : index
    %c0_14 = arith.constant 0 : index
    %27 = vector.load %arg5[%c0_12, %c0_13, %c0_14] : memref<4x8x128xbf16, #tpu.memory_space<vmem>>, vector<1x8x128xbf16>
    %28 = vector.shape_cast %27 : vector<1x8x128xbf16> to vector<8x128xbf16>
    %cst_15 = arith.constant dense<0.000000e+00> : vector<2x128xf32>
    %29 = tpu.matmul %26, %28, %cst_15 {dimension_numbers = #tpu.dot_dimension_numbers<[1], [0], [0], [1], [0, 0, 1, 1], [], []>} : vector<2x8xbf16>, vector<8x128xbf16>, vector<2x128xf32> -> vector<2x128xf32>
    %30 = vector.shape_cast %29 : vector<2x128xf32> to vector<2x8x16xf32>
    %31 = arith.truncf %30 : vector<2x8x16xf32> to vector<2x8x16xbf16>
    "tpu.trace_start"() <{level = 10 : i32, message = "bse,beo->bso"}> : () -> ()
    %cst_16 = arith.constant dense<0.000000e+00> : vector<2x16x16xf32>
    %32 = tpu.matmul %24, %31, %cst_16 {dimension_numbers = #tpu.dot_dimension_numbers<[2], [1], [1], [2], [0, 0, 0, 1, 1, 2], [0], [0]>} : vector<2x16x8xbf16>, vector<2x8x16xbf16>, vector<2x16x16xf32> -> vector<2x16x16xf32>
    "tpu.trace_stop"() : () -> ()
    %cst_17 = arith.constant dense<0xFF800000> : vector<2x16xf32>
    %33 = vector.multi_reduction <maximumf>, %32, %cst_17 [2] : vector<2x16x16xf32> to vector<2x16xf32>
    %34 = vector.shape_cast %33 : vector<2x16xf32> to vector<2x16x1xf32>
    %35 = vector.broadcast %34 : vector<2x16x1xf32> to vector<2x16x16xf32>
    %36 = arith.subf %32, %35 : vector<2x16x16xf32>
    %37 = math.exp %36 : vector<2x16x16xf32>
    %cst_18 = arith.constant dense<0.000000e+00> : vector<2x16xf32>
    %38 = vector.multi_reduction <add>, %37, %cst_18 [2] : vector<2x16x16xf32> to vector<2x16xf32>
    %39 = vector.shape_cast %38 : vector<2x16xf32> to vector<2x16x1xf32>
    %40 = vector.broadcast %39 : vector<2x16x1xf32> to vector<2x16x16xf32>
    %41 = arith.divf %37, %40 : vector<2x16x16xf32>
    %c0_19 = arith.constant 0 : index
    %c0_20 = arith.constant 0 : index
    %c0_21 = arith.constant 0 : index
    %c0_22 = arith.constant 0 : index
    %42 = vector.load %arg9[%c0_19, %c0_20, %c0_21, %c0_22] : memref<2x4x16x16xf32, #tpu.memory_space<vmem>>, vector<2x1x16x16xf32>
    %43 = vector.shape_cast %42 : vector<2x1x16x16xf32> to vector<2x16x16xf32>
    %44 = vector.shape_cast %41 : vector<2x16x16xf32> to vector<2x1x16x16xf32>
    tpu.vector_store %arg9[%c0_19, %c0_20, %c0_21, %c0_22], %44 {strides = array<i32>} : memref<2x4x16x16xf32, #tpu.memory_space<vmem>>, vector<2x1x16x16xf32>,
    %45 = arith.truncf %41 : vector<2x16x16xf32> to vector<2x16x16xbf16>
    "tpu.trace_start"() <{level = 10 : i32, message = "bso,boe->bse"}> : () -> ()
    %cst_23 = arith.constant dense<0.000000e+00> : vector<2x16x8xf32>
    %46 = tpu.matmul %45, %24, %cst_23 {dimension_numbers = #tpu.dot_dimension_numbers<[2], [1], [1], [2], [0, 0, 0, 1, 1, 2], [0], [0]>} : vector<2x16x16xbf16>, vector<2x16x8xbf16>, vector<2x16x8xf32> -> vector<2x16x8xf32>
    "tpu.trace_stop"() : () -> ()
    %47 = vector.shape_cast %46 : vector<2x16x8xf32> to vector<32x8xf32>
    %48 = arith.truncf %47 : vector<32x8xf32> to vector<32x8xbf16>
    %49 = vector.extract_strided_slice %11 {offsets = [0, 8], sizes = [32, 8], strides = [1, 1]} : vector<32x32xf32> to vector<32x8xf32>
    %cst_24 = arith.constant dense<0xFF800000> : vector<32xf32>
    %50 = vector.multi_reduction <maximumf>, %49, %cst_24 [1] : vector<32x8xf32> to vector<32xf32>
    %51 = vector.shape_cast %50 : vector<32xf32> to vector<32x1xf32>
    %52 = vector.broadcast %51 : vector<32x1xf32> to vector<32x8xf32>
    %53 = arith.subf %49, %52 : vector<32x8xf32>
    %54 = math.exp %53 : vector<32x8xf32>
    %cst_25 = arith.constant dense<0.000000e+00> : vector<32xf32>
    %55 = vector.multi_reduction <add>, %54, %cst_25 [1] : vector<32x8xf32> to vector<32xf32>
    %56 = vector.shape_cast %55 : vector<32xf32> to vector<32x1xf32>
    %57 = tpu.reciprocal %56 {approx = true} : vector<32x1xf32> -> vector<32x1xf32>
    %58 = vector.broadcast %57 : vector<32x1xf32> to vector<32x8xf32>
    %59 = arith.mulf %54, %58 : vector<32x8xf32>
    %60 = vector.shape_cast %59 : vector<32x8xf32> to vector<2x16x8xf32>
    %61 = arith.truncf %60 : vector<2x16x8xf32> to vector<2x16x8xbf16>
    %cst_26 = arith.constant dense<0.000000e+00> : vector<2x8xf32>
    %62 = vector.multi_reduction <add>, %60, %cst_26 [1] : vector<2x16x8xf32> to vector<2x8xf32>
    %63 = arith.truncf %62 : vector<2x8xf32> to vector<2x8xbf16>
    %c1 = arith.constant 1 : index
    %c0_27 = arith.constant 0 : index
    %c0_28 = arith.constant 0 : index
    %64 = vector.load %arg5[%c1, %c0_27, %c0_28] : memref<4x8x128xbf16, #tpu.memory_space<vmem>>, vector<1x8x128xbf16>
    %65 = vector.shape_cast %64 : vector<1x8x128xbf16> to vector<8x128xbf16>
    %cst_29 = arith.constant dense<0.000000e+00> : vector<2x128xf32>
    %66 = tpu.matmul %63, %65, %cst_29 {dimension_numbers = #tpu.dot_dimension_numbers<[1], [0], [0], [1], [0, 0, 1, 1], [], []>} : vector<2x8xbf16>, vector<8x128xbf16>, vector<2x128xf32> -> vector<2x128xf32>
    %67 = vector.shape_cast %66 : vector<2x128xf32> to vector<2x8x16xf32>
    %68 = arith.truncf %67 : vector<2x8x16xf32> to vector<2x8x16xbf16>
    "tpu.trace_start"() <{level = 10 : i32, message = "bse,beo->bso"}> : () -> ()
    %cst_30 = arith.constant dense<0.000000e+00> : vector<2x16x16xf32>
    %69 = tpu.matmul %61, %68, %cst_30 {dimension_numbers = #tpu.dot_dimension_numbers<[2], [1], [1], [2], [0, 0, 0, 1, 1, 2], [0], [0]>} : vector<2x16x8xbf16>, vector<2x8x16xbf16>, vector<2x16x16xf32> -> vector<2x16x16xf32>
    "tpu.trace_stop"() : () -> ()
    %cst_31 = arith.constant dense<0xFF800000> : vector<2x16xf32>
    %70 = vector.multi_reduction <maximumf>, %69, %cst_31 [2] : vector<2x16x16xf32> to vector<2x16xf32>
    %71 = vector.shape_cast %70 : vector<2x16xf32> to vector<2x16x1xf32>
    %72 = vector.broadcast %71 : vector<2x16x1xf32> to vector<2x16x16xf32>
    %73 = arith.subf %69, %72 : vector<2x16x16xf32>
    %74 = math.exp %73 : vector<2x16x16xf32>
    %cst_32 = arith.constant dense<0.000000e+00> : vector<2x16xf32>
    %75 = vector.multi_reduction <add>, %74, %cst_32 [2] : vector<2x16x16xf32> to vector<2x16xf32>
    %76 = vector.shape_cast %75 : vector<2x16xf32> to vector<2x16x1xf32>
    %77 = vector.broadcast %76 : vector<2x16x1xf32> to vector<2x16x16xf32>
    %78 = arith.divf %74, %77 : vector<2x16x16xf32>
    %c0_33 = arith.constant 0 : index
    %c1_34 = arith.constant 1 : index
    %c0_35 = arith.constant 0 : index
    %c0_36 = arith.constant 0 : index
    %79 = vector.load %arg9[%c0_33, %c1_34, %c0_35, %c0_36] : memref<2x4x16x16xf32, #tpu.memory_space<vmem>>, vector<2x1x16x16xf32>
    %80 = vector.shape_cast %79 : vector<2x1x16x16xf32> to vector<2x16x16xf32>
    %81 = vector.shape_cast %78 : vector<2x16x16xf32> to vector<2x1x16x16xf32>
    tpu.vector_store %arg9[%c0_33, %c1_34, %c0_35, %c0_36], %81 {strides = array<i32>} : memref<2x4x16x16xf32, #tpu.memory_space<vmem>>, vector<2x1x16x16xf32>,
    %82 = arith.truncf %78 : vector<2x16x16xf32> to vector<2x16x16xbf16>
    "tpu.trace_start"() <{level = 10 : i32, message = "bso,boe->bse"}> : () -> ()
    %cst_37 = arith.constant dense<0.000000e+00> : vector<2x16x8xf32>
    %83 = tpu.matmul %82, %61, %cst_37 {dimension_numbers = #tpu.dot_dimension_numbers<[2], [1], [1], [2], [0, 0, 0, 1, 1, 2], [0], [0]>} : vector<2x16x16xbf16>, vector<2x16x8xbf16>, vector<2x16x8xf32> -> vector<2x16x8xf32>
    "tpu.trace_stop"() : () -> ()
    %84 = vector.shape_cast %83 : vector<2x16x8xf32> to vector<32x8xf32>
    %85 = arith.truncf %84 : vector<32x8xf32> to vector<32x8xbf16>
    %86 = vector.extract_strided_slice %11 {offsets = [0, 16], sizes = [32, 8], strides = [1, 1]} : vector<32x32xf32> to vector<32x8xf32>
    %cst_38 = arith.constant dense<0xFF800000> : vector<32xf32>
    %87 = vector.multi_reduction <maximumf>, %86, %cst_38 [1] : vector<32x8xf32> to vector<32xf32>
    %88 = vector.shape_cast %87 : vector<32xf32> to vector<32x1xf32>
    %89 = vector.broadcast %88 : vector<32x1xf32> to vector<32x8xf32>
    %90 = arith.subf %86, %89 : vector<32x8xf32>
    %91 = math.exp %90 : vector<32x8xf32>
    %cst_39 = arith.constant dense<0.000000e+00> : vector<32xf32>
    %92 = vector.multi_reduction <add>, %91, %cst_39 [1] : vector<32x8xf32> to vector<32xf32>
    %93 = vector.shape_cast %92 : vector<32xf32> to vector<32x1xf32>
    %94 = tpu.reciprocal %93 {approx = true} : vector<32x1xf32> -> vector<32x1xf32>
    %95 = vector.broadcast %94 : vector<32x1xf32> to vector<32x8xf32>
    %96 = arith.mulf %91, %95 : vector<32x8xf32>
    %97 = vector.shape_cast %96 : vector<32x8xf32> to vector<2x16x8xf32>
    %98 = arith.truncf %97 : vector<2x16x8xf32> to vector<2x16x8xbf16>
    %cst_40 = arith.constant dense<0.000000e+00> : vector<2x8xf32>
    %99 = vector.multi_reduction <add>, %97, %cst_40 [1] : vector<2x16x8xf32> to vector<2x8xf32>
    %100 = arith.truncf %99 : vector<2x8xf32> to vector<2x8xbf16>
    %c2 = arith.constant 2 : index
    %c0_41 = arith.constant 0 : index
    %c0_42 = arith.constant 0 : index
    %101 = vector.load %arg5[%c2, %c0_41, %c0_42] : memref<4x8x128xbf16, #tpu.memory_space<vmem>>, vector<1x8x128xbf16>
    %102 = vector.shape_cast %101 : vector<1x8x128xbf16> to vector<8x128xbf16>
    %cst_43 = arith.constant dense<0.000000e+00> : vector<2x128xf32>
    %103 = tpu.matmul %100, %102, %cst_43 {dimension_numbers = #tpu.dot_dimension_numbers<[1], [0], [0], [1], [0, 0, 1, 1], [], []>} : vector<2x8xbf16>, vector<8x128xbf16>, vector<2x128xf32> -> vector<2x128xf32>
    %104 = vector.shape_cast %103 : vector<2x128xf32> to vector<2x8x16xf32>
    %105 = arith.truncf %104 : vector<2x8x16xf32> to vector<2x8x16xbf16>
    "tpu.trace_start"() <{level = 10 : i32, message = "bse,beo->bso"}> : () -> ()
    %cst_44 = arith.constant dense<0.000000e+00> : vector<2x16x16xf32>
    %106 = tpu.matmul %98, %105, %cst_44 {dimension_numbers = #tpu.dot_dimension_numbers<[2], [1], [1], [2], [0, 0, 0, 1, 1, 2], [0], [0]>} : vector<2x16x8xbf16>, vector<2x8x16xbf16>, vector<2x16x16xf32> -> vector<2x16x16xf32>
    "tpu.trace_stop"() : () -> ()
    %cst_45 = arith.constant dense<0xFF800000> : vector<2x16xf32>
    %107 = vector.multi_reduction <maximumf>, %106, %cst_45 [2] : vector<2x16x16xf32> to vector<2x16xf32>
    %108 = vector.shape_cast %107 : vector<2x16xf32> to vector<2x16x1xf32>
    %109 = vector.broadcast %108 : vector<2x16x1xf32> to vector<2x16x16xf32>
    %110 = arith.subf %106, %109 : vector<2x16x16xf32>
    %111 = math.exp %110 : vector<2x16x16xf32>
    %cst_46 = arith.constant dense<0.000000e+00> : vector<2x16xf32>
    %112 = vector.multi_reduction <add>, %111, %cst_46 [2] : vector<2x16x16xf32> to vector<2x16xf32>
    %113 = vector.shape_cast %112 : vector<2x16xf32> to vector<2x16x1xf32>
    %114 = vector.broadcast %113 : vector<2x16x1xf32> to vector<2x16x16xf32>
    %115 = arith.divf %111, %114 : vector<2x16x16xf32>
    %c0_47 = arith.constant 0 : index
    %c2_48 = arith.constant 2 : index
    %c0_49 = arith.constant 0 : index
    %c0_50 = arith.constant 0 : index
    %116 = vector.load %arg9[%c0_47, %c2_48, %c0_49, %c0_50] : memref<2x4x16x16xf32, #tpu.memory_space<vmem>>, vector<2x1x16x16xf32>
    %117 = vector.shape_cast %116 : vector<2x1x16x16xf32> to vector<2x16x16xf32>
    %118 = vector.shape_cast %115 : vector<2x16x16xf32> to vector<2x1x16x16xf32>
    tpu.vector_store %arg9[%c0_47, %c2_48, %c0_49, %c0_50], %118 {strides = array<i32>} : memref<2x4x16x16xf32, #tpu.memory_space<vmem>>, vector<2x1x16x16xf32>,
    %119 = arith.truncf %115 : vector<2x16x16xf32> to vector<2x16x16xbf16>
    "tpu.trace_start"() <{level = 10 : i32, message = "bso,boe->bse"}> : () -> ()
    %cst_51 = arith.constant dense<0.000000e+00> : vector<2x16x8xf32>
    %120 = tpu.matmul %119, %98, %cst_51 {dimension_numbers = #tpu.dot_dimension_numbers<[2], [1], [1], [2], [0, 0, 0, 1, 1, 2], [0], [0]>} : vector<2x16x16xbf16>, vector<2x16x8xbf16>, vector<2x16x8xf32> -> vector<2x16x8xf32>
    "tpu.trace_stop"() : () -> ()
    %121 = vector.shape_cast %120 : vector<2x16x8xf32> to vector<32x8xf32>
    %122 = arith.truncf %121 : vector<32x8xf32> to vector<32x8xbf16>
    %123 = vector.extract_strided_slice %11 {offsets = [0, 24], sizes = [32, 8], strides = [1, 1]} : vector<32x32xf32> to vector<32x8xf32>
    %cst_52 = arith.constant dense<0xFF800000> : vector<32xf32>
    %124 = vector.multi_reduction <maximumf>, %123, %cst_52 [1] : vector<32x8xf32> to vector<32xf32>
    %125 = vector.shape_cast %124 : vector<32xf32> to vector<32x1xf32>
    %126 = vector.broadcast %125 : vector<32x1xf32> to vector<32x8xf32>
    %127 = arith.subf %123, %126 : vector<32x8xf32>
    %128 = math.exp %127 : vector<32x8xf32>
    %cst_53 = arith.constant dense<0.000000e+00> : vector<32xf32>
    %129 = vector.multi_reduction <add>, %128, %cst_53 [1] : vector<32x8xf32> to vector<32xf32>
    %130 = vector.shape_cast %129 : vector<32xf32> to vector<32x1xf32>
    %131 = tpu.reciprocal %130 {approx = true} : vector<32x1xf32> -> vector<32x1xf32>
    %132 = vector.broadcast %131 : vector<32x1xf32> to vector<32x8xf32>
    %133 = arith.mulf %128, %132 : vector<32x8xf32>
    %134 = vector.shape_cast %133 : vector<32x8xf32> to vector<2x16x8xf32>
    %135 = arith.truncf %134 : vector<2x16x8xf32> to vector<2x16x8xbf16>
    %cst_54 = arith.constant dense<0.000000e+00> : vector<2x8xf32>
    %136 = vector.multi_reduction <add>, %134, %cst_54 [1] : vector<2x16x8xf32> to vector<2x8xf32>
    %137 = arith.truncf %136 : vector<2x8xf32> to vector<2x8xbf16>
    %c3 = arith.constant 3 : index
    %c0_55 = arith.constant 0 : index
    %c0_56 = arith.constant 0 : index
    %138 = vector.load %arg5[%c3, %c0_55, %c0_56] : memref<4x8x128xbf16, #tpu.memory_space<vmem>>, vector<1x8x128xbf16>
    %139 = vector.shape_cast %138 : vector<1x8x128xbf16> to vector<8x128xbf16>
    %cst_57 = arith.constant dense<0.000000e+00> : vector<2x128xf32>
    %140 = tpu.matmul %137, %139, %cst_57 {dimension_numbers = #tpu.dot_dimension_numbers<[1], [0], [0], [1], [0, 0, 1, 1], [], []>} : vector<2x8xbf16>, vector<8x128xbf16>, vector<2x128xf32> -> vector<2x128xf32>
    %141 = vector.shape_cast %140 : vector<2x128xf32> to vector<2x8x16xf32>
    %142 = arith.truncf %141 : vector<2x8x16xf32> to vector<2x8x16xbf16>
    "tpu.trace_start"() <{level = 10 : i32, message = "bse,beo->bso"}> : () -> ()
    %cst_58 = arith.constant dense<0.000000e+00> : vector<2x16x16xf32>
    %143 = tpu.matmul %135, %142, %cst_58 {dimension_numbers = #tpu.dot_dimension_numbers<[2], [1], [1], [2], [0, 0, 0, 1, 1, 2], [0], [0]>} : vector<2x16x8xbf16>, vector<2x8x16xbf16>, vector<2x16x16xf32> -> vector<2x16x16xf32>
    "tpu.trace_stop"() : () -> ()
    %cst_59 = arith.constant dense<0xFF800000> : vector<2x16xf32>
    %144 = vector.multi_reduction <maximumf>, %143, %cst_59 [2] : vector<2x16x16xf32> to vector<2x16xf32>
    %145 = vector.shape_cast %144 : vector<2x16xf32> to vector<2x16x1xf32>
    %146 = vector.broadcast %145 : vector<2x16x1xf32> to vector<2x16x16xf32>
    %147 = arith.subf %143, %146 : vector<2x16x16xf32>
    %148 = math.exp %147 : vector<2x16x16xf32>
    %cst_60 = arith.constant dense<0.000000e+00> : vector<2x16xf32>
    %149 = vector.multi_reduction <add>, %148, %cst_60 [2] : vector<2x16x16xf32> to vector<2x16xf32>
    %150 = vector.shape_cast %149 : vector<2x16xf32> to vector<2x16x1xf32>
    %151 = vector.broadcast %150 : vector<2x16x1xf32> to vector<2x16x16xf32>
    %152 = arith.divf %148, %151 : vector<2x16x16xf32>
    %c0_61 = arith.constant 0 : index
    %c3_62 = arith.constant 3 : index
    %c0_63 = arith.constant 0 : index
    %c0_64 = arith.constant 0 : index
    %153 = vector.load %arg9[%c0_61, %c3_62, %c0_63, %c0_64] : memref<2x4x16x16xf32, #tpu.memory_space<vmem>>, vector<2x1x16x16xf32>
    %154 = vector.shape_cast %153 : vector<2x1x16x16xf32> to vector<2x16x16xf32>
    %155 = vector.shape_cast %152 : vector<2x16x16xf32> to vector<2x1x16x16xf32>
    tpu.vector_store %arg9[%c0_61, %c3_62, %c0_63, %c0_64], %155 {strides = array<i32>} : memref<2x4x16x16xf32, #tpu.memory_space<vmem>>, vector<2x1x16x16xf32>,
    %156 = arith.truncf %152 : vector<2x16x16xf32> to vector<2x16x16xbf16>
    "tpu.trace_start"() <{level = 10 : i32, message = "bso,boe->bse"}> : () -> ()
    %cst_65 = arith.constant dense<0.000000e+00> : vector<2x16x8xf32>
    %157 = tpu.matmul %156, %135, %cst_65 {dimension_numbers = #tpu.dot_dimension_numbers<[2], [1], [1], [2], [0, 0, 0, 1, 1, 2], [0], [0]>} : vector<2x16x16xbf16>, vector<2x16x8xbf16>, vector<2x16x8xf32> -> vector<2x16x8xf32>
    "tpu.trace_stop"() : () -> ()
    %158 = vector.shape_cast %157 : vector<2x16x8xf32> to vector<32x8xf32>
    %159 = arith.truncf %158 : vector<32x8xf32> to vector<32x8xbf16>
    %160 = tpu.concatenate %48, %85, %122, %159 in 1 : vector<32x8xbf16>, vector<32x8xbf16>, vector<32x8xbf16>, vector<32x8xbf16> -> vector<32x32xbf16>
    %c0_66 = arith.constant 0 : index
    %c0_67 = arith.constant 0 : index
    %161 = vector.load %arg10[%c0_66, %c0_67] : memref<32x32xf32, #tpu.memory_space<vmem>>, vector<32x32xf32>
    %c0_68 = arith.constant 0 : index
    %c0_69 = arith.constant 0 : index
    %c0_70 = arith.constant 0 : index
    %162 = vector.load %arg6[%c0_68, %c0_69, %c0_70] : memref<1x32x32xbf16, #tpu.memory_space<vmem>>, vector<1x32x32xbf16>
    %163 = vector.shape_cast %162 : vector<1x32x32xbf16> to vector<32x32xbf16>
    %cst_71 = arith.constant dense<0.000000e+00> : vector<32x32xf32>
    %164 = tpu.matmul %160, %163, %cst_71 {dimension_numbers = #tpu.dot_dimension_numbers<[1], [0], [0], [1], [0, 0, 1, 1], [], []>} : vector<32x32xbf16>, vector<32x32xbf16>, vector<32x32xf32> -> vector<32x32xf32>
    %165 = arith.addf %161, %164 : vector<32x32xf32>
    %c0_72 = arith.constant 0 : index
    %c0_73 = arith.constant 0 : index
    %166 = vector.load %arg10[%c0_72, %c0_73] : memref<32x32xf32, #tpu.memory_space<vmem>>, vector<32x32xf32>
    tpu.vector_store %arg10[%c0_72, %c0_73], %165 {strides = array<i32>} : memref<32x32xf32, #tpu.memory_space<vmem>>, vector<32x32xf32>,
    %c0_i32_74 = arith.constant 0 : i32
    %167 = arith.cmpi eq, %arg1, %c0_i32_74 : i32
    %168 = arith.extui %167 : i1 to i32
    %c0_i32_75 = arith.constant 0 : i32
    %169 = arith.cmpi ne, %168, %c0_i32_75 : i32
    scf.if %169 {
      %c0_76 = arith.constant 0 : index
      %c0_77 = arith.constant 0 : index
      %170 = vector.load %arg10[%c0_76, %c0_77] : memref<32x32xf32, #tpu.memory_space<vmem>>, vector<32x32xf32>
      %c0_78 = arith.constant 0 : index
      %c0_79 = arith.constant 0 : index
      %171 = vector.load %arg7[%c0_78, %c0_79] : memref<1x32xf32, #tpu.memory_space<vmem>>, vector<1x32xf32>
      %172 = vector.broadcast %171 : vector<1x32xf32> to vector<32x32xf32>
      %173 = arith.addf %170, %172 : vector<32x32xf32>
      %174 = vector.shape_cast %173 : vector<32x32xf32> to vector<2x16x32xf32>
      %c0_80 = arith.constant 0 : index
      %c0_81 = arith.constant 0 : index
      %c0_82 = arith.constant 0 : index
      %175 = vector.load %arg8[%c0_80, %c0_81, %c0_82] : memref<2x16x32xf32, #tpu.memory_space<vmem>>, vector<2x16x32xf32>
      tpu.vector_store %arg8[%c0_80, %c0_81, %c0_82], %174 {strides = array<i32>} : memref<2x16x32xf32, #tpu.memory_space<vmem>>, vector<2x16x32xf32>,
    } else {
    }
    return
  }
  func.func @transform_0(%arg0: i32, %arg1: i32) -> (i32, i32, i32) {
    %c0_i32 = arith.constant 0 : i32
    %c0_i32_0 = arith.constant 0 : i32
    %c0_i32_1 = arith.constant 0 : i32
    return %arg0, %c0_i32, %c0_i32_0 : i32, i32, i32
  }
  func.func @transform_1(%arg0: i32, %arg1: i32) -> (i32, i32, i32) {
    %c0_i32 = arith.constant 0 : i32
    %c0_i32_0 = arith.constant 0 : i32
    %c0_i32_1 = arith.constant 0 : i32
    return %arg1, %c0_i32, %c0_i32_0 : i32, i32, i32
  }
  func.func @transform_2(%arg0: i32, %arg1: i32) -> (i32, i32, i32) {
    %c0_i32 = arith.constant 0 : i32
    %c0_i32_0 = arith.constant 0 : i32
    %c0_i32_1 = arith.constant 0 : i32
    return %arg1, %c0_i32, %c0_i32_0 : i32, i32, i32
  }
  func.func @transform_3(%arg0: i32, %arg1: i32) -> (i32, i32, i32) {
    %c0_i32 = arith.constant 0 : i32
    %c0_i32_0 = arith.constant 0 : i32
    %c0_i32_1 = arith.constant 0 : i32
    return %arg1, %c0_i32, %c0_i32_0 : i32, i32, i32
  }
  func.func @transform_4(%arg0: i32, %arg1: i32) -> (i32, i32, i32) {
    %c0_i32 = arith.constant 0 : i32
    %c0_i32_0 = arith.constant 0 : i32
    %c0_i32_1 = arith.constant 0 : i32
    return %arg1, %c0_i32, %c0_i32_0 : i32, i32, i32
  }
  func.func @transform_5(%arg0: i32, %arg1: i32) -> (i32, i32) {
    %c0_i32 = arith.constant 0 : i32
    %c0_i32_0 = arith.constant 0 : i32
    %c0_i32_1 = arith.constant 0 : i32
    return %c0_i32, %c0_i32_0 : i32, i32
  }
  func.func @transform_6(%arg0: i32, %arg1: i32) -> (i32, i32, i32) {
    %c0_i32 = arith.constant 0 : i32
    %c0_i32_0 = arith.constant 0 : i32
    %c0_i32_1 = arith.constant 0 : i32
    return %arg0, %c0_i32, %c0_i32_0 : i32, i32, i32
  }
  func.func @transform_7(%arg0: i32, %arg1: i32) -> (i32, i32, i32, i32) {
    %c0_i32 = arith.constant 0 : i32
    %c0_i32_0 = arith.constant 0 : i32
    %c0_i32_1 = arith.constant 0 : i32
    return %arg0, %arg1, %c0_i32, %c0_i32_0 : i32, i32, i32, i32
  }
}

</mosaic_0001>

<llo_original>
// kernel: tpu_custom_call.1
$region0: #{tpu_custom_call.1}
  #allocation0 [shape = 'u32[]', space=smem, size = 0x4, offset = 0x4, fixed_abs, tag = 'smem constant byte address 0x4 - core index']
  #allocation1 [shape = 'u32[144,128]{1,0:T(1,128)}', space=vmem, size = 0x12000, scoped, tag = 'internal scratch']
  #allocation2 [shape = 'f32[32,32]{1,0:T(8,128)}', space=vmem, size = 0x4000, scoped, tag = 'scratch operand']
  %s0 = inlined_call_operand.hbm [shape: bf16[2,16,32], index: 0, kind: input, shape index: {}]
  %s1 = inlined_call_operand.hbm [shape: bf16[1,32,32], index: 1, kind: input, shape index: {}]
  %s2 = inlined_call_operand.vmem [shape: f32[1,1,32], index: 2, kind: input, shape index: {}]
  %s3 = inlined_call_operand.hbm [shape: bf16[4,8,128], index: 3, kind: input, shape index: {}]
  %s4 = inlined_call_operand.hbm [shape: bf16[1,32,32], index: 4, kind: input, shape index: {}]
  %s5 = inlined_call_operand.vmem [shape: f32[1,32], index: 5, kind: input, shape index: {}]
  %s6 = inlined_call_operand.hbm [shape: f32[2,16,32], index: 6, kind: output, shape index: {0}]
  %s7 = inlined_call_operand.hbm [shape: f32[2,4,16,16], index: 7, kind: output, shape index: {1}]
  %8 = xla_tuple %s6, %s7
  %s9 = sld [smem:[#allocation0]]
  $region66: #{tpu_custom_call.1} parent=0
    _
  %s11 = ssub.s32 1, %s9
  %s12 = scalar_select 0, %s11, %s9
  $region1: #{tpu_custom_call.1} parent=0
    #allocation3 [shape = 'u8[8192]{0}', space=vmem, size = 0x2000, scoped, tag = 'input window, operand 0, single buffered']
    #allocation4 [shape = 's32[1]{0}', space=sflag, size = 0x4, scoped, tag = 'scoped memory for tpu_custom_call.1']
    #allocation5 [shape = 's32[1]{0}', space=sflag, size = 0x4, scoped, tag = 'scoped memory for tpu_custom_call.1']
    #allocation6 [shape = 'u8[8192]{0}', space=vmem, size = 0x2000, scoped, tag = 'input window, operand 1, single buffered']
    #allocation7 [shape = 's32[1]{0}', space=sflag, size = 0x4, scoped, tag = 'scoped memory for tpu_custom_call.1']
    #allocation8 [shape = 'u8[8192]{0}', space=vmem, size = 0x2000, scoped, tag = 'input window, operand 3, single buffered']
    #allocation9 [shape = 'u8[8192]{0}', space=vmem, size = 0x2000, scoped, tag = 'input window, operand 4, single buffered']
    #allocation10 [shape = 's32[1]{0}', space=sflag, size = 0x4, scoped, tag = 'scoped memory for tpu_custom_call.1']
    #allocation11 [shape = 'u8[16384]{0}', space=vmem, size = 0x4000, scoped, tag = 'output window, operand 0, single buffered']
    #allocation12 [shape = 'u8[65536]{0}', space=vmem, size = 0x10000, scoped, tag = 'output window, operand 1, single buffered']
    #allocation13 [shape = 's32[1]{0}', space=sflag, size = 0x4, scoped, tag = 'scoped memory for tpu_custom_call.1']
    %13 = vsyncpa [#allocation4], 0
    %14 = vsyncpa [#allocation7], 0
    %15 = vsyncpa [#allocation10], 0
    %16 = vsyncpa [#allocation5], 0
    %17 = vsyncpa [#allocation13], 0
    // Predicated region
    $region2: #{tpu_custom_call.1} parent=1 // pred_check
      _
    $region3: #{tpu_custom_call.1} parent=1 // pred_check_branch
      %19 = sbr.rel (0) target = $region5
    $region4: #{tpu_custom_call.1} parent=1 // pred_region
      %s21 = ssub.s32 256, 256
      %22 = vsyncadd [#allocation4], %s21
      %s23 = sshll.u32 [#allocation3], 4
      %s24 = int_to_ptr.vmem [resolvable:$true] %s23
      %29 = dma.hbm_to_vmem [thread:$0]  %s0, 256, %s24, [#allocation4], 64, 64, 4
    $region5: #{tpu_custom_call.1} parent=1 // pred_fallthru
      _
    // Predicated region
    $region6: #{tpu_custom_call.1} parent=1 // pred_check
      _
    $region7: #{tpu_custom_call.1} parent=1 // pred_check_branch
      %31 = sbr.rel (0) target = $region9
    $region8: #{tpu_custom_call.1} parent=1 // pred_region
      %s33 = ssub.s32 256, 256
      %34 = vsyncadd [#allocation7], %s33
      %s35 = sshll.u32 [#allocation6], 4
      %s36 = int_to_ptr.vmem [resolvable:$true] %s35
      %41 = dma.hbm_to_vmem [thread:$0]  %s1, 256, %s36, [#allocation7], 64, 64, 4
    $region9: #{tpu_custom_call.1} parent=1 // pred_fallthru
      _
    // Predicated region
    $region10: #{tpu_custom_call.1} parent=1 // pred_check
      _
    $region11: #{tpu_custom_call.1} parent=1 // pred_check_branch
      %43 = sbr.rel (0) target = $region13
    $region12: #{tpu_custom_call.1} parent=1 // pred_region
      _
    $region13: #{tpu_custom_call.1} parent=1 // pred_fallthru
      _
    // Predicated region
    $region14: #{tpu_custom_call.1} parent=1 // pred_check
      _
    $region15: #{tpu_custom_call.1} parent=1 // pred_check_branch
      %45 = sbr.rel (0) target = $region17
    $region16: #{tpu_custom_call.1} parent=1 // pred_region
      %s47 = ssub.s32 256, 256
      %48 = vsyncadd [#allocation7], %s47
      %s49 = sshll.u32 [#allocation8], 4
      %s50 = int_to_ptr.vmem [resolvable:$true] %s49
      %55 = dma.hbm_to_vmem [thread:$0]  %s3, 256, %s50, [#allocation7], 64, 64, 4
    $region17: #{tpu_custom_call.1} parent=1 // pred_fallthru
      _
    // Predicated region
    $region18: #{tpu_custom_call.1} parent=1 // pred_check
      _
    $region19: #{tpu_custom_call.1} parent=1 // pred_check_branch
      %57 = sbr.rel (0) target = $region21
    $region20: #{tpu_custom_call.1} parent=1 // pred_region
      %s59 = ssub.s32 256, 256
      %60 = vsyncadd [#allocation10], %s59
      %s61 = sshll.u32 [#allocation9], 4
      %s62 = int_to_ptr.vmem [resolvable:$true] %s61
      %67 = dma.hbm_to_vmem [thread:$0]  %s4, 256, %s62, [#allocation10], 64, 64, 4
    $region21: #{tpu_custom_call.1} parent=1 // pred_fallthru
      _
    // Predicated region
    $region22: #{tpu_custom_call.1} parent=1 // pred_check
      _
    $region23: #{tpu_custom_call.1} parent=1 // pred_check_branch
      %69 = sbr.rel (0) target = $region25
    $region24: #{tpu_custom_call.1} parent=1 // pred_region
      _
    $region25: #{tpu_custom_call.1} parent=1 // pred_fallthru
      _
    // Predicated region
    $region26: #{tpu_custom_call.1} parent=1 // pred_check
      _
    $region27: #{tpu_custom_call.1} parent=1 // pred_check_branch
      %71 = sbr.rel (0) target = $region29
    $region28: #{tpu_custom_call.1} parent=1 // pred_region
      %72 = dma.done [#allocation4], 256
    $region29: #{tpu_custom_call.1} parent=1 // pred_fallthru
      _
    // Predicated region
    $region30: #{tpu_custom_call.1} parent=1 // pred_check
      _
    $region31: #{tpu_custom_call.1} parent=1 // pred_check_branch
      %74 = sbr.rel (0) target = $region33
    $region32: #{tpu_custom_call.1} parent=1 // pred_region
      %75 = dma.done [#allocation7], 256
    $region33: #{tpu_custom_call.1} parent=1 // pred_fallthru
      _
    // Predicated region
    $region34: #{tpu_custom_call.1} parent=1 // pred_check
      _
    $region35: #{tpu_custom_call.1} parent=1 // pred_check_branch
      %77 = sbr.rel (0) target = $region37
    $region36: #{tpu_custom_call.1} parent=1 // pred_region
      %78 = dma.done [#allocation7], 256
    $region37: #{tpu_custom_call.1} parent=1 // pred_fallthru
      _
    // Predicated region
    $region38: #{tpu_custom_call.1} parent=1 // pred_check
      _
    $region39: #{tpu_custom_call.1} parent=1 // pred_check_branch
      %80 = sbr.rel (0) target = $region41
    $region40: #{tpu_custom_call.1} parent=1 // pred_region
      %81 = dma.done [#allocation10], 256
    $region41: #{tpu_custom_call.1} parent=1 // pred_fallthru
      _
    %p83 = scmp.eq.s32.totalorder 0, 0
    // Predicated region
    $region42: #{tpu_custom_call.1} parent=1 // pred_check
      %p84 = pneg %p83
    $region43: #{tpu_custom_call.1} parent=1 // pred_check_branch
      %86 = sbr.rel (%p84) target = $region45
    $region44: #{tpu_custom_call.1} parent=1 // pred_region
      %vm87 = vcmask 261120
      %88 = vst.msk [vmem:[#allocation2] sm:$0xff] %vm87, 0.0
      %89 = vst.msk [vmem:[#allocation2 + $0x8] sm:$0xff] %vm87, 0.0
      %90 = vst.msk [vmem:[#allocation2 + $0x10] sm:$0xff] %vm87, 0.0
      %91 = vst.msk [vmem:[#allocation2 + $0x18] sm:$0xff] %vm87, 0.0
    $region45: #{tpu_custom_call.1} parent=1 // pred_fallthru
      _
    %v92 = vld [vmem:[#allocation3] sm:$0xf]
    %v93 = vld [vmem:[#allocation3 + $0x4] sm:$0xf]
    %v94 = vld [vmem:[#allocation3 + $0x8] sm:$0xf]
    %v95 = vld [vmem:[#allocation3 + $0xc] sm:$0xf]
    %v96 = vld [vmem:[#allocation6] sm:$0xf]
    %v97 = vld [vmem:[#allocation6 + $0x4] sm:$0xf]
    %v98 = vld [vmem:[#allocation6 + $0x8] sm:$0xf]
    %v99 = vld [vmem:[#allocation6 + $0xc] sm:$0xf]
    %v100 = vld [vmem:[%s2] sm:$0x1]
    %v102 = vlaneseq
    %v103 = vshrl.u32 %v102, 7
    %v104 = vsub.s32 0, %v103
    %v105 = vrot.slane %v100, %v104
    %v111 = vunpack.c.l.b16 %v92
    %v112 = vunpack.c.l.b16 %v93
    %v113 = vunpack.c.l.b16 %v94
    %v114 = vunpack.c.l.b16 %v95
    %v115 = vpack.c.b16 %v112, %v111
    %v116 = vpack.c.b16 %v114, %v113
    %v121 = vunpack.c.l.b16 %v96
    %v122 = vunpack.c.l.b16 %v97
    %v123 = vunpack.c.l.b16 %v98
    %v124 = vunpack.c.l.b16 %v99
    %v125 = vpack.c.b16 %v122, %v121
    %v126 = vpack.c.b16 %v124, %v123
    %vm129 = vcmask 261120
    %v131 = vsel %vm129, %v115, 0
    %v134 = vsel %vm129, %v116, 0
    %136 = vmatprep.subr.bf16.mxu0 0
    %137 = vmatpush1.bf16.msra.mxu0 %v125
    %138 = vmatprep.subr.bf16.mxu0 0
    %139 = vmatpush1.bf16.msra.mxu0 %v126
    %140 = vmatprep.subr.bf16.mxu0 0
    %141 = vmatpush1.bf16.msra.mxu0 0
    %142 = vmatprep.subr.bf16.mxu0 0
    %143 = vmatpush1.bf16.msra.mxu0 0
    %144 = vmatprep.subr.bf16.mxu0 0
    %145 = vmatpush1.bf16.msra.mxu0 0
    %146 = vmatprep.subr.bf16.mxu0 0
    %147 = vmatpush1.bf16.msra.mxu0 0
    %148 = vmatprep.subr.bf16.mxu0 0
    %149 = vmatpush1.bf16.msra.mxu0 0
    %150 = vmatprep.subr.bf16.mxu0 0
    %151 = vmatpush1.bf16.msra.mxu0 0
    %152 = vmatprep.subr.bf16.mxu0 0
    %153 = vmatpush1.bf16.msra.mxu0 0
    %154 = vmatprep.subr.bf16.mxu0 0
    %155 = vmatpush1.bf16.msra.mxu0 0
    %156 = vmatprep.subr.bf16.mxu0 0
    %157 = vmatpush1.bf16.msra.mxu0 0
    %158 = vmatprep.subr.bf16.mxu0 0
    %159 = vmatpush1.bf16.msra.mxu0 0
    %160 = vmatprep.subr.bf16.mxu0 0
    %161 = vmatpush1.bf16.msra.mxu0 0
    %162 = vmatprep.subr.bf16.mxu0 0
    %163 = vmatpush1.bf16.msra.mxu0 0
    %164 = vmatprep.subr.bf16.mxu0 0
    %165 = vmatpush1.bf16.msra.mxu0 0
    %166 = vmatprep.subr.bf16.mxu0 0
    %167 = vmatpush1.bf16.msra.mxu0 0
    %168 = vmatprep.mubr.bf16.mxu0 0
    %169 = vmatmul.mubr.bf16.gmra.mrb[0].mxu0 %v131
    %v170 = vpop.f32.mrb[0].mxu0
    %v171 = vadd.f32 %v105, %v170
    %v172 = vpop.f32.mrb[0].mxu0
    %v173 = vpop.f32.mrb[0].mxu0
    %v174 = vadd.f32 %v105, %v173
    %v175 = vpop.f32.mrb[0].mxu0
    %176 = vmatprep.mubr.bf16.mxu0 0
    %177 = vmatmul.mubr.bf16.gmra.mrb[0].mxu0 %v134
    %v178 = vpop.f32.mrb[0].mxu0
    %v179 = vadd.f32 %v105, %v178
    %v180 = vpop.f32.mrb[0].mxu0
    %v181 = vpop.f32.mrb[0].mxu0
    %v182 = vadd.f32 %v105, %v181
    %v183 = vpop.f32.mrb[0].mxu0
    %184 = vdwg.mxu0
    %vm185 = vcmask 64512
    %v186 = vsel %vm185, %v171, -inf
    %187 = vmax.xlane.f32.xlu0 %v186
    %v188 = vpop.xlane.xlu0 %187
    %v189 = vsel %vm185, %v174, -inf
    %190 = vmax.xlane.f32.xlu0 %v189
    %v191 = vpop.xlane.xlu0 %190
    %v192 = vsel %vm185, %v179, -inf
    %193 = vmax.xlane.f32.xlu0 %v192
    %v194 = vpop.xlane.xlu0 %193
    %v195 = vsel %vm185, %v182, -inf
    %196 = vmax.xlane.f32.xlu0 %v195
    %v197 = vpop.xlane.xlu0 %196
    %v198 = vsub.f32 %v171, %v188
    %v199 = vsub.f32 %v174, %v191
    %v200 = vsub.f32 %v179, %v194
    %v201 = vsub.f32 %v182, %v197
    %v202 = vmul.f32 %v198, 1.442695
    %v203 = vpow.pop %v202
    %v204 = vmul.f32 %v199, 1.442695
    %v205 = vpow.pop %v204
    %v206 = vmul.f32 %v200, 1.442695
    %v207 = vpow.pop %v206
    %v208 = vmul.f32 %v201, 1.442695
    %v209 = vpow.pop %v208
    %v210 = vsel %vm185, %v203, 0.0
    %211 = vadd.xlane.f32.xlu0 %v210
    %v212 = vpop.xlane.xlu0 %211
    %v213 = vsel %vm185, %v205, 0.0
    %214 = vadd.xlane.f32.xlu0 %v213
    %v215 = vpop.xlane.xlu0 %214
    %v216 = vsel %vm185, %v207, 0.0
    %217 = vadd.xlane.f32.xlu0 %v216
    %v218 = vpop.xlane.xlu0 %217
    %v219 = vsel %vm185, %v209, 0.0
    %220 = vadd.xlane.f32.xlu0 %v219
    %v221 = vpop.xlane.xlu0 %220
    %v222 = vrcp.pop %v212
    %v223 = vrcp.pop %v215
    %v224 = vrcp.pop %v218
    %v225 = vrcp.pop %v221
    %v226 = vmul.f32 %v203, %v222
    %v227 = vmul.f32 %v205, %v223
    %v228 = vmul.f32 %v207, %v224
    %v229 = vmul.f32 %v209, %v225
    %v230 = vpack.c.bf16 %v227, %v226
    %v231 = vpack.c.bf16 %v229, %v228
    %v232 = vsel %vm185, %v226, 0.0
    %v233 = vsel %vm185, %v227, 0.0
    %v234 = vadd.f32 %v232, %v233
    %v235 = vrot.slane %v234, 4
    %v236 = vadd.f32 %v234, %v235
    %v237 = vrot.slane %v236, 2
    %v238 = vadd.f32 %v236, %v237
    %v239 = vrot.slane %v238, 1
    %v240 = vadd.f32 %v238, %v239
    %v241 = vsel %vm185, %v228, 0.0
    %v242 = vsel %vm185, %v229, 0.0
    %v243 = vadd.f32 %v241, %v242
    %v244 = vrot.slane %v243, 4
    %v245 = vadd.f32 %v243, %v244
    %v246 = vrot.slane %v245, 2
    %v247 = vadd.f32 %v245, %v246
    %v248 = vrot.slane %v247, 1
    %v249 = vadd.f32 %v247, %v248
    %v250 = vpack.c.bf16 %v240, %v240
    %v251 = vpack.c.bf16 %v249, %v249
    %v252 = vld [vmem:[#allocation8] sm:$0xf]
    %v255 = vunpack.c.l.b16 %v250
    %v256 = vunpack.c.l.b16 %v251
    %vm257 = vcmask 1041409
    %v258 = vsel %vm257, %v256, %v255
    %v259 = vpack.c.b16 %v258, %v258
    %v261 = vsel %vm185, %v259, 0
    %vm263 = vcmask 1043456
    %v265 = vsel %vm263, %v252, 0
    %267 = vmatprep.subr.bf16.mxu0 0
    %268 = vmatpush1.bf16.msra.mxu0 %v265
    %269 = vmatprep.subr.bf16.mxu0 0
    %270 = vmatpush1.bf16.msra.mxu0 0
    %271 = vmatprep.subr.bf16.mxu0 0
    %272 = vmatpush1.bf16.msra.mxu0 0
    %273 = vmatprep.subr.bf16.mxu0 0
    %274 = vmatpush1.bf16.msra.mxu0 0
    %275 = vmatprep.subr.bf16.mxu0 0
    %276 = vmatpush1.bf16.msra.mxu0 0
    %277 = vmatprep.subr.bf16.mxu0 0
    %278 = vmatpush1.bf16.msra.mxu0 0
    %279 = vmatprep.subr.bf16.mxu0 0
    %280 = vmatpush1.bf16.msra.mxu0 0
    %281 = vmatprep.subr.bf16.mxu0 0
    %282 = vmatpush1.bf16.msra.mxu0 0
    %283 = vmatprep.subr.bf16.mxu0 0
    %284 = vmatpush1.bf16.msra.mxu0 0
    %285 = vmatprep.subr.bf16.mxu0 0
    %286 = vmatpush1.bf16.msra.mxu0 0
    %287 = vmatprep.subr.bf16.mxu0 0
    %288 = vmatpush1.bf16.msra.mxu0 0
    %289 = vmatprep.subr.bf16.mxu0 0
    %290 = vmatpush1.bf16.msra.mxu0 0
    %291 = vmatprep.subr.bf16.mxu0 0
    %292 = vmatpush1.bf16.msra.mxu0 0
    %293 = vmatprep.subr.bf16.mxu0 0
    %294 = vmatpush1.bf16.msra.mxu0 0
    %295 = vmatprep.subr.bf16.mxu0 0
    %296 = vmatpush1.bf16.msra.mxu0 0
    %297 = vmatprep.subr.bf16.mxu0 0
    %298 = vmatpush1.bf16.msra.mxu0 0
    %299 = vmatprep.mubr.bf16.mxu0 0
    %300 = vmatmul.mubr.bf16.gmra.mrb[0].mxu0 %v261
    %v301 = vpop.f32.mrb[0].mxu0
    %v302 = vadd.f32 0.0, %v301
    %v303 = vpop.f32.mrb[0].mxu0
    %v304 = vpop.f32.mrb[0].mxu0
    %v305 = vpop.f32.mrb[0].mxu0
    %306 = vdwg.mxu0
    %308 = vrot.lane.b32.xlu0 %v302, 112
    %v309 = vpop.permute.xlu0 %308
    %311 = vrot.lane.b32.xlu0 %v302, 96
    %v312 = vpop.permute.xlu0 %311
    %314 = vrot.lane.b32.xlu0 %v302, 80
    %v315 = vpop.permute.xlu0 %314
    %317 = vrot.lane.b32.xlu0 %v302, 64
    %v318 = vpop.permute.xlu0 %317
    %320 = vrot.lane.b32.xlu0 %v302, 48
    %v321 = vpop.permute.xlu0 %320
    %323 = vrot.lane.b32.xlu0 %v302, 32
    %v324 = vpop.permute.xlu0 %323
    %326 = vrot.lane.b32.xlu0 %v302, 16
    %v327 = vpop.permute.xlu0 %326
    %v329 = vcombine.low %v302, %v312
    %v331 = vunpack.c.l.s4 1983009808
    %v332 = vunpack.c.0.s8 %v331
    %v333 = vlaneseq
    %v334 = vshrl.u32 %v333, 7
    %v335 = vsub.s32 %v332, %v334
    %v336 = vrot.slane %v329, %v335
    %v337 = vcombine.low %v309, %v315
    %v339 = vunpack.c.l.s4 1983009808
    %v340 = vunpack.c.0.s8 %v339
    %v341 = vlaneseq
    %v342 = vshrl.u32 %v341, 7
    %v343 = vsub.s32 %v340, %v342
    %v344 = vrot.slane %v337, %v343
    %v345 = vcombine.low %v318, %v324
    %v347 = vunpack.c.l.s4 1983009808
    %v348 = vunpack.c.0.s8 %v347
    %v349 = vlaneseq
    %v350 = vshrl.u32 %v349, 7
    %v351 = vsub.s32 %v348, %v350
    %v352 = vrot.slane %v345, %v351
    %v353 = vcombine.low %v321, %v327
    %v355 = vunpack.c.l.s4 1983009808
    %v356 = vunpack.c.0.s8 %v355
    %v357 = vlaneseq
    %v358 = vshrl.u32 %v357, 7
    %v359 = vsub.s32 %v356, %v358
    %v360 = vrot.slane %v353, %v359
    %v361 = vcombine.low %v336, %v344
    %v363 = vunpack.c.l.s4 1934713408
    %v364 = vunpack.c.0.s8 %v363
    %v365 = vlaneseq
    %v366 = vshrl.u32 %v365, 7
    %v367 = vsub.s32 %v364, %v366
    %v368 = vrot.slane %v361, %v367
    %v369 = vcombine.low %v352, %v360
    %v371 = vunpack.c.l.s4 1934713408
    %v372 = vunpack.c.0.s8 %v371
    %v373 = vlaneseq
    %v374 = vshrl.u32 %v373, 7
    %v375 = vsub.s32 %v372, %v374
    %v376 = vrot.slane %v369, %v375
    %v377 = vcombine.low %v368, %v376
    %v378 = vcombine.high %v368, %v376
    %v379 = vpack.c.bf16 %v377, %v377
    %v380 = vpack.c.bf16 %v378, %v378
    %v382 = vsel %vm185, %v230, 0
    %v385 = vsel %vm263, %v379, 0
    %387 = vmatprep.subr.bf16.mxu0 0
    %388 = vmatpush1.bf16.msra.mxu0 %v385
    %389 = vmatprep.subr.bf16.mxu0 0
    %390 = vmatpush1.bf16.msra.mxu0 0
    %391 = vmatprep.subr.bf16.mxu0 0
    %392 = vmatpush1.bf16.msra.mxu0 0
    %393 = vmatprep.subr.bf16.mxu0 0
    %394 = vmatpush1.bf16.msra.mxu0 0
    %395 = vmatprep.subr.bf16.mxu0 0
    %396 = vmatpush1.bf16.msra.mxu0 0
    %397 = vmatprep.subr.bf16.mxu0 0
    %398 = vmatpush1.bf16.msra.mxu0 0
    %399 = vmatprep.subr.bf16.mxu0 0
    %400 = vmatpush1.bf16.msra.mxu0 0
    %401 = vmatprep.subr.bf16.mxu0 0
    %402 = vmatpush1.bf16.msra.mxu0 0
    %403 = vmatprep.subr.bf16.mxu0 0
    %404 = vmatpush1.bf16.msra.mxu0 0
    %405 = vmatprep.subr.bf16.mxu0 0
    %406 = vmatpush1.bf16.msra.mxu0 0
    %407 = vmatprep.subr.bf16.mxu0 0
    %408 = vmatpush1.bf16.msra.mxu0 0
    %409 = vmatprep.subr.bf16.mxu0 0
    %410 = vmatpush1.bf16.msra.mxu0 0
    %411 = vmatprep.subr.bf16.mxu0 0
    %412 = vmatpush1.bf16.msra.mxu0 0
    %413 = vmatprep.subr.bf16.mxu0 0
    %414 = vmatpush1.bf16.msra.mxu0 0
    %415 = vmatprep.subr.bf16.mxu0 0
    %416 = vmatpush1.bf16.msra.mxu0 0
    %417 = vmatprep.subr.bf16.mxu0 0
    %418 = vmatpush1.bf16.msra.mxu0 0
    %419 = vmatprep.mubr.bf16.mxu0 0
    %420 = vmatmul.mubr.bf16.gmra.mrb[0].mxu0 %v382
    %v421 = vpop.f32.mrb[0].mxu0
    %v422 = vadd.f32 0.0, %v421
    %v423 = vpop.f32.mrb[0].mxu0
    %v424 = vpop.f32.mrb[0].mxu0
    %v425 = vadd.f32 0.0, %v424
    %v426 = vpop.f32.mrb[0].mxu0
    %427 = vdwg.mxu0
    %v429 = vsel %vm185, %v231, 0
    %v432 = vsel %vm263, %v380, 0
    %434 = vmatprep.subr.bf16.mxu0 0
    %435 = vmatpush1.bf16.msra.mxu0 %v432
    %436 = vmatprep.subr.bf16.mxu0 0
    %437 = vmatpush1.bf16.msra.mxu0 0
    %438 = vmatprep.subr.bf16.mxu0 0
    %439 = vmatpush1.bf16.msra.mxu0 0
    %440 = vmatprep.subr.bf16.mxu0 0
    %441 = vmatpush1.bf16.msra.mxu0 0
    %442 = vmatprep.subr.bf16.mxu0 0
    %443 = vmatpush1.bf16.msra.mxu0 0
    %444 = vmatprep.subr.bf16.mxu0 0
    %445 = vmatpush1.bf16.msra.mxu0 0
    %446 = vmatprep.subr.bf16.mxu0 0
    %447 = vmatpush1.bf16.msra.mxu0 0
    %448 = vmatprep.subr.bf16.mxu0 0
    %449 = vmatpush1.bf16.msra.mxu0 0
    %450 = vmatprep.subr.bf16.mxu0 0
    %451 = vmatpush1.bf16.msra.mxu0 0
    %452 = vmatprep.subr.bf16.mxu0 0
    %453 = vmatpush1.bf16.msra.mxu0 0
    %454 = vmatprep.subr.bf16.mxu0 0
    %455 = vmatpush1.bf16.msra.mxu0 0
    %456 = vmatprep.subr.bf16.mxu0 0
    %457 = vmatpush1.bf16.msra.mxu0 0
    %458 = vmatprep.subr.bf16.mxu0 0
    %459 = vmatpush1.bf16.msra.mxu0 0
    %460 = vmatprep.subr.bf16.mxu0 0
    %461 = vmatpush1.bf16.msra.mxu0 0
    %462 = vmatprep.subr.bf16.mxu0 0
    %463 = vmatpush1.bf16.msra.mxu0 0
    %464 = vmatprep.subr.bf16.mxu0 0
    %465 = vmatpush1.bf16.msra.mxu0 0
    %466 = vmatprep.mubr.bf16.mxu0 0
    %467 = vmatmul.mubr.bf16.gmra.mrb[0].mxu0 %v429
    %v468 = vpop.f32.mrb[0].mxu0
    %v469 = vadd.f32 0.0, %v468
    %v470 = vpop.f32.mrb[0].mxu0
    %v471 = vpop.f32.mrb[0].mxu0
    %v472 = vadd.f32 0.0, %v471
    %v473 = vpop.f32.mrb[0].mxu0
    %474 = vdwg.mxu0
    %vm475 = vcmask 130048
    %v476 = vsel %vm475, %v422, -inf
    %477 = vmax.xlane.f32.xlu0 %v476
    %v478 = vpop.xlane.xlu0 %477
    %v479 = vsel %vm475, %v425, -inf
    %480 = vmax.xlane.f32.xlu0 %v479
    %v481 = vpop.xlane.xlu0 %480
    %v482 = vsel %vm475, %v469, -inf
    %483 = vmax.xlane.f32.xlu0 %v482
    %v484 = vpop.xlane.xlu0 %483
    %v485 = vsel %vm475, %v472, -inf
    %486 = vmax.xlane.f32.xlu0 %v485
    %v487 = vpop.xlane.xlu0 %486
    %v488 = vsub.f32 %v422, %v478
    %v489 = vsub.f32 %v425, %v481
    %v490 = vsub.f32 %v469, %v484
    %v491 = vsub.f32 %v472, %v487
    %v492 = vmul.f32 %v488, 1.442695
    %v493 = vpow.pop %v492
    %v494 = vmul.f32 %v489, 1.442695
    %v495 = vpow.pop %v494
    %v496 = vmul.f32 %v490, 1.442695
    %v497 = vpow.pop %v496
    %v498 = vmul.f32 %v491, 1.442695
    %v499 = vpow.pop %v498
    %v500 = vsel %vm475, %v493, 0.0
    %501 = vadd.xlane.f32.xlu0 %v500
    %v502 = vpop.xlane.xlu0 %501
    %v503 = vsel %vm475, %v495, 0.0
    %504 = vadd.xlane.f32.xlu0 %v503
    %v505 = vpop.xlane.xlu0 %504
    %v506 = vsel %vm475, %v497, 0.0
    %507 = vadd.xlane.f32.xlu0 %v506
    %v508 = vpop.xlane.xlu0 %507
    %v509 = vsel %vm475, %v499, 0.0
    %510 = vadd.xlane.f32.xlu0 %v509
    %v511 = vpop.xlane.xlu0 %510
    %v512 = vrcp.pop %v502
    %v513 = vmul.f32 %v493, %v512
    %v514 = vrcp.pop %v505
    %v515 = vmul.f32 %v495, %v514
    %v516 = vrcp.pop %v508
    %v517 = vmul.f32 %v497, %v516
    %v518 = vrcp.pop %v511
    %v519 = vmul.f32 %v499, %v518
    %520 = vst.msk [vmem:[#allocation12] sm:$0xff] %vm475, %v513
    %521 = vst.msk [vmem:[#allocation12 + $0x8] sm:$0xff] %vm475, %v515
    %522 = vst.msk [vmem:[#allocation12 + $0x40] sm:$0xff] %vm475, %v517
    %523 = vst.msk [vmem:[#allocation12 + $0x48] sm:$0xff] %vm475, %v519
    %v524 = vpack.c.bf16 %v515, %v513
    %v525 = vpack.c.bf16 %v519, %v517
    %v527 = vsel %vm475, %v524, 0
    %529 = vmatprep.subr.bf16.mxu0 0
    %530 = vmatpush1.bf16.msra.mxu0 %v230
    %531 = vmatprep.subr.bf16.mxu0 0
    %532 = vmatpush1.bf16.msra.mxu0 0
    %533 = vmatprep.subr.bf16.mxu0 0
    %534 = vmatpush1.bf16.msra.mxu0 0
    %535 = vmatprep.subr.bf16.mxu0 0
    %536 = vmatpush1.bf16.msra.mxu0 0
    %537 = vmatprep.subr.bf16.mxu0 0
    %538 = vmatpush1.bf16.msra.mxu0 0
    %539 = vmatprep.subr.bf16.mxu0 0
    %540 = vmatpush1.bf16.msra.mxu0 0
    %541 = vmatprep.subr.bf16.mxu0 0
    %542 = vmatpush1.bf16.msra.mxu0 0
    %543 = vmatprep.subr.bf16.mxu0 0
    %544 = vmatpush1.bf16.msra.mxu0 0
    %545 = vmatprep.subr.bf16.mxu0 0
    %546 = vmatpush1.bf16.msra.mxu0 0
    %547 = vmatprep.subr.bf16.mxu0 0
    %548 = vmatpush1.bf16.msra.mxu0 0
    %549 = vmatprep.subr.bf16.mxu0 0
    %550 = vmatpush1.bf16.msra.mxu0 0
    %551 = vmatprep.subr.bf16.mxu0 0
    %552 = vmatpush1.bf16.msra.mxu0 0
    %553 = vmatprep.subr.bf16.mxu0 0
    %554 = vmatpush1.bf16.msra.mxu0 0
    %555 = vmatprep.subr.bf16.mxu0 0
    %556 = vmatpush1.bf16.msra.mxu0 0
    %557 = vmatprep.subr.bf16.mxu0 0
    %558 = vmatpush1.bf16.msra.mxu0 0
    %559 = vmatprep.subr.bf16.mxu0 0
    %560 = vmatpush1.bf16.msra.mxu0 0
    %561 = vmatprep.mubr.bf16.mxu0 0
    %562 = vmatmul.mubr.bf16.gmra.mrb[0].mxu0 %v527
    %v563 = vpop.f32.mrb[0].mxu0
    %v564 = vadd.f32 0.0, %v563
    %v565 = vpop.f32.mrb[0].mxu0
    %v566 = vpop.f32.mrb[0].mxu0
    %v567 = vadd.f32 0.0, %v566
    %v568 = vpop.f32.mrb[0].mxu0
    %569 = vdwg.mxu0
    %v571 = vsel %vm475, %v525, 0
    %573 = vmatprep.subr.bf16.mxu0 0
    %574 = vmatpush1.bf16.msra.mxu0 %v231
    %575 = vmatprep.subr.bf16.mxu0 0
    %576 = vmatpush1.bf16.msra.mxu0 0
    %577 = vmatprep.subr.bf16.mxu0 0
    %578 = vmatpush1.bf16.msra.mxu0 0
    %579 = vmatprep.subr.bf16.mxu0 0
    %580 = vmatpush1.bf16.msra.mxu0 0
    %581 = vmatprep.subr.bf16.mxu0 0
    %582 = vmatpush1.bf16.msra.mxu0 0
    %583 = vmatprep.subr.bf16.mxu0 0
    %584 = vmatpush1.bf16.msra.mxu0 0
    %585 = vmatprep.subr.bf16.mxu0 0
    %586 = vmatpush1.bf16.msra.mxu0 0
    %587 = vmatprep.subr.bf16.mxu0 0
    %588 = vmatpush1.bf16.msra.mxu0 0
    %589 = vmatprep.subr.bf16.mxu0 0
    %590 = vmatpush1.bf16.msra.mxu0 0
    %591 = vmatprep.subr.bf16.mxu0 0
    %592 = vmatpush1.bf16.msra.mxu0 0
    %593 = vmatprep.subr.bf16.mxu0 0
    %594 = vmatpush1.bf16.msra.mxu0 0
    %595 = vmatprep.subr.bf16.mxu0 0
    %596 = vmatpush1.bf16.msra.mxu0 0
    %597 = vmatprep.subr.bf16.mxu0 0
    %598 = vmatpush1.bf16.msra.mxu0 0
    %599 = vmatprep.subr.bf16.mxu0 0
    %600 = vmatpush1.bf16.msra.mxu0 0
    %601 = vmatprep.subr.bf16.mxu0 0
    %602 = vmatpush1.bf16.msra.mxu0 0
    %603 = vmatprep.subr.bf16.mxu0 0
    %604 = vmatpush1.bf16.msra.mxu0 0
    %605 = vmatprep.mubr.bf16.mxu0 0
    %606 = vmatmul.mubr.bf16.gmra.mrb[0].mxu0 %v571
    %v607 = vpop.f32.mrb[0].mxu0
    %v608 = vadd.f32 0.0, %v607
    %v609 = vpop.f32.mrb[0].mxu0
    %v610 = vpop.f32.mrb[0].mxu0
    %v611 = vadd.f32 0.0, %v610
    %v612 = vpop.f32.mrb[0].mxu0
    %613 = vdwg.mxu0
    %v614 = vpack.c.bf16 %v567, %v564
    %v615 = vpack.c.bf16 %v611, %v608
    %vm616 = vcmask 130112
    %v617 = vsel %vm616, %v171, -inf
    %618 = vmax.xlane.f32.xlu0 %v617
    %v619 = vpop.xlane.xlu0 %618
    %v620 = vsel %vm616, %v174, -inf
    %621 = vmax.xlane.f32.xlu0 %v620
    %v622 = vpop.xlane.xlu0 %621
    %v623 = vsel %vm616, %v179, -inf
    %624 = vmax.xlane.f32.xlu0 %v623
    %v625 = vpop.xlane.xlu0 %624
    %v626 = vsel %vm616, %v182, -inf
    %627 = vmax.xlane.f32.xlu0 %v626
    %v628 = vpop.xlane.xlu0 %627
    %v629 = vsub.f32 %v171, %v619
    %v630 = vsub.f32 %v174, %v622
    %v631 = vsub.f32 %v179, %v625
    %v632 = vsub.f32 %v182, %v628
    %v633 = vmul.f32 %v629, 1.442695
    %v634 = vpow.pop %v633
    %v635 = vmul.f32 %v630, 1.442695
    %v636 = vpow.pop %v635
    %v637 = vmul.f32 %v631, 1.442695
    %v638 = vpow.pop %v637
    %v639 = vmul.f32 %v632, 1.442695
    %v640 = vpow.pop %v639
    %645 = vrot.lane.b32.xlu0 %v634, 120
    %v646 = vpop.permute.xlu0 %645
    %647 = vrot.lane.b32.xlu0 %v636, 120
    %v648 = vpop.permute.xlu0 %647
    %649 = vrot.lane.b32.xlu0 %v638, 120
    %v650 = vpop.permute.xlu0 %649
    %651 = vrot.lane.b32.xlu0 %v640, 120
    %v652 = vpop.permute.xlu0 %651
    %v657 = vsel %vm185, %v646, 0.0
    %658 = vadd.xlane.f32.xlu0 %v657
    %v659 = vpop.xlane.xlu0 %658
    %v660 = vsel %vm185, %v648, 0.0
    %661 = vadd.xlane.f32.xlu0 %v660
    %v662 = vpop.xlane.xlu0 %661
    %v663 = vsel %vm185, %v650, 0.0
    %664 = vadd.xlane.f32.xlu0 %v663
    %v665 = vpop.xlane.xlu0 %664
    %v666 = vsel %vm185, %v652, 0.0
    %667 = vadd.xlane.f32.xlu0 %v666
    %v668 = vpop.xlane.xlu0 %667
    %v669 = vrcp.pop %v659
    %v670 = vrcp.pop %v662
    %v671 = vrcp.pop %v665
    %v672 = vrcp.pop %v668
    %v673 = vmul.f32 %v634, %v669
    %v674 = vmul.f32 %v636, %v670
    %v675 = vmul.f32 %v638, %v671
    %v676 = vmul.f32 %v640, %v672
    %v677 = vpack.c.bf16 %v674, %v673
    %v678 = vpack.c.bf16 %v676, %v675
    %v679 = vsel %vm616, %v673, 0.0
    %v680 = vsel %vm616, %v674, 0.0
    %v681 = vadd.f32 %v679, %v680
    %v682 = vrot.slane %v681, 4
    %v683 = vadd.f32 %v681, %v682
    %v684 = vrot.slane %v683, 2
    %v685 = vadd.f32 %v683, %v684
    %v686 = vrot.slane %v685, 1
    %v687 = vadd.f32 %v685, %v686
    %v688 = vsel %vm616, %v675, 0.0
    %v689 = vsel %vm616, %v676, 0.0
    %v690 = vadd.f32 %v688, %v689
    %v691 = vrot.slane %v690, 4
    %v692 = vadd.f32 %v690, %v691
    %v693 = vrot.slane %v692, 2
    %v694 = vadd.f32 %v692, %v693
    %v695 = vrot.slane %v694, 1
    %v696 = vadd.f32 %v694, %v695
    %v697 = vpack.c.bf16 %v687, %v687
    %v698 = vpack.c.bf16 %v696, %v696
    %s699 = scalar_lea.vmem [#allocation8], 4
    %v700 = vld [vmem:[%s699] sm:$0xf]
    %v703 = vunpack.c.l.b16 %v697
    %v704 = vunpack.c.l.b16 %v698
    %v705 = vsel %vm257, %v704, %v703
    %v706 = vpack.c.b16 %v705, %v705
    %707 = vrot.lane.b32.xlu0 %v706, 120
    %v708 = vpop.permute.xlu0 %707
    %v710 = vsel %vm185, %v708, 0
    %v713 = vsel %vm263, %v700, 0
    %715 = vmatprep.subr.bf16.mxu0 0
    %716 = vmatpush1.bf16.msra.mxu0 %v713
    %717 = vmatprep.subr.bf16.mxu0 0
    %718 = vmatpush1.bf16.msra.mxu0 0
    %719 = vmatprep.subr.bf16.mxu0 0
    %720 = vmatpush1.bf16.msra.mxu0 0
    %721 = vmatprep.subr.bf16.mxu0 0
    %722 = vmatpush1.bf16.msra.mxu0 0
    %723 = vmatprep.subr.bf16.mxu0 0
    %724 = vmatpush1.bf16.msra.mxu0 0
    %725 = vmatprep.subr.bf16.mxu0 0
    %726 = vmatpush1.bf16.msra.mxu0 0
    %727 = vmatprep.subr.bf16.mxu0 0
    %728 = vmatpush1.bf16.msra.mxu0 0
    %729 = vmatprep.subr.bf16.mxu0 0
    %730 = vmatpush1.bf16.msra.mxu0 0
    %731 = vmatprep.subr.bf16.mxu0 0
    %732 = vmatpush1.bf16.msra.mxu0 0
    %733 = vmatprep.subr.bf16.mxu0 0
    %734 = vmatpush1.bf16.msra.mxu0 0
    %735 = vmatprep.subr.bf16.mxu0 0
    %736 = vmatpush1.bf16.msra.mxu0 0
    %737 = vmatprep.subr.bf16.mxu0 0
    %738 = vmatpush1.bf16.msra.mxu0 0
    %739 = vmatprep.subr.bf16.mxu0 0
    %740 = vmatpush1.bf16.msra.mxu0 0
    %741 = vmatprep.subr.bf16.mxu0 0
    %742 = vmatpush1.bf16.msra.mxu0 0
    %743 = vmatprep.subr.bf16.mxu0 0
    %744 = vmatpush1.bf16.msra.mxu0 0
    %745 = vmatprep.subr.bf16.mxu0 0
    %746 = vmatpush1.bf16.msra.mxu0 0
    %747 = vmatprep.mubr.bf16.mxu0 0
    %748 = vmatmul.mubr.bf16.gmra.mrb[0].mxu0 %v710
    %v749 = vpop.f32.mrb[0].mxu0
    %v750 = vadd.f32 0.0, %v749
    %v751 = vpop.f32.mrb[0].mxu0
    %v752 = vpop.f32.mrb[0].mxu0
    %v753 = vpop.f32.mrb[0].mxu0
    %754 = vdwg.mxu0
    %756 = vrot.lane.b32.xlu0 %v750, 112
    %v757 = vpop.permute.xlu0 %756
    %759 = vrot.lane.b32.xlu0 %v750, 96
    %v760 = vpop.permute.xlu0 %759
    %762 = vrot.lane.b32.xlu0 %v750, 80
    %v763 = vpop.permute.xlu0 %762
    %765 = vrot.lane.b32.xlu0 %v750, 64
    %v766 = vpop.permute.xlu0 %765
    %768 = vrot.lane.b32.xlu0 %v750, 48
    %v769 = vpop.permute.xlu0 %768
    %771 = vrot.lane.b32.xlu0 %v750, 32
    %v772 = vpop.permute.xlu0 %771
    %774 = vrot.lane.b32.xlu0 %v750, 16
    %v775 = vpop.permute.xlu0 %774
    %v777 = vcombine.low %v750, %v760
    %v779 = vunpack.c.l.s4 1983009808
    %v780 = vunpack.c.0.s8 %v779
    %v781 = vlaneseq
    %v782 = vshrl.u32 %v781, 7
    %v783 = vsub.s32 %v780, %v782
    %v784 = vrot.slane %v777, %v783
    %v785 = vcombine.low %v757, %v763
    %v787 = vunpack.c.l.s4 1983009808
    %v788 = vunpack.c.0.s8 %v787
    %v789 = vlaneseq
    %v790 = vshrl.u32 %v789, 7
    %v791 = vsub.s32 %v788, %v790
    %v792 = vrot.slane %v785, %v791
    %v793 = vcombine.low %v766, %v772
    %v795 = vunpack.c.l.s4 1983009808
    %v796 = vunpack.c.0.s8 %v795
    %v797 = vlaneseq
    %v798 = vshrl.u32 %v797, 7
    %v799 = vsub.s32 %v796, %v798
    %v800 = vrot.slane %v793, %v799
    %v801 = vcombine.low %v769, %v775
    %v803 = vunpack.c.l.s4 1983009808
    %v804 = vunpack.c.0.s8 %v803
    %v805 = vlaneseq
    %v806 = vshrl.u32 %v805, 7
    %v807 = vsub.s32 %v804, %v806
    %v808 = vrot.slane %v801, %v807
    %v809 = vcombine.low %v784, %v792
    %v811 = vunpack.c.l.s4 1934713408
    %v812 = vunpack.c.0.s8 %v811
    %v813 = vlaneseq
    %v814 = vshrl.u32 %v813, 7
    %v815 = vsub.s32 %v812, %v814
    %v816 = vrot.slane %v809, %v815
    %v817 = vcombine.low %v800, %v808
    %v819 = vunpack.c.l.s4 1934713408
    %v820 = vunpack.c.0.s8 %v819
    %v821 = vlaneseq
    %v822 = vshrl.u32 %v821, 7
    %v823 = vsub.s32 %v820, %v822
    %v824 = vrot.slane %v817, %v823
    %v825 = vcombine.low %v816, %v824
    %v826 = vcombine.high %v816, %v824
    %v827 = vpack.c.bf16 %v825, %v825
    %v828 = vpack.c.bf16 %v826, %v826
    %830 = vrot.lane.b32.xlu0 %v677, 120
    %v831 = vpop.permute.xlu0 %830
    %v833 = vsel %vm185, %v831, 0
    %v836 = vsel %vm263, %v827, 0
    %838 = vmatprep.subr.bf16.mxu0 0
    %839 = vmatpush1.bf16.msra.mxu0 %v836
    %840 = vmatprep.subr.bf16.mxu0 0
    %841 = vmatpush1.bf16.msra.mxu0 0
    %842 = vmatprep.subr.bf16.mxu0 0
    %843 = vmatpush1.bf16.msra.mxu0 0
    %844 = vmatprep.subr.bf16.mxu0 0
    %845 = vmatpush1.bf16.msra.mxu0 0
    %846 = vmatprep.subr.bf16.mxu0 0
    %847 = vmatpush1.bf16.msra.mxu0 0
    %848 = vmatprep.subr.bf16.mxu0 0
    %849 = vmatpush1.bf16.msra.mxu0 0
    %850 = vmatprep.subr.bf16.mxu0 0
    %851 = vmatpush1.bf16.msra.mxu0 0
    %852 = vmatprep.subr.bf16.mxu0 0
    %853 = vmatpush1.bf16.msra.mxu0 0
    %854 = vmatprep.subr.bf16.mxu0 0
    %855 = vmatpush1.bf16.msra.mxu0 0
    %856 = vmatprep.subr.bf16.mxu0 0
    %857 = vmatpush1.bf16.msra.mxu0 0
    %858 = vmatprep.subr.bf16.mxu0 0
    %859 = vmatpush1.bf16.msra.mxu0 0
    %860 = vmatprep.subr.bf16.mxu0 0
    %861 = vmatpush1.bf16.msra.mxu0 0
    %862 = vmatprep.subr.bf16.mxu0 0
    %863 = vmatpush1.bf16.msra.mxu0 0
    %864 = vmatprep.subr.bf16.mxu0 0
    %865 = vmatpush1.bf16.msra.mxu0 0
    %866 = vmatprep.subr.bf16.mxu0 0
    %867 = vmatpush1.bf16.msra.mxu0 0
    %868 = vmatprep.subr.bf16.mxu0 0
    %869 = vmatpush1.bf16.msra.mxu0 0
    %870 = vmatprep.mubr.bf16.mxu0 0
    %871 = vmatmul.mubr.bf16.gmra.mrb[0].mxu0 %v833
    %v872 = vpop.f32.mrb[0].mxu0
    %v873 = vadd.f32 0.0, %v872
    %v874 = vpop.f32.mrb[0].mxu0
    %v875 = vpop.f32.mrb[0].mxu0
    %v876 = vadd.f32 0.0, %v875
    %v877 = vpop.f32.mrb[0].mxu0
    %878 = vdwg.mxu0
    %880 = vrot.lane.b32.xlu0 %v678, 120
    %v881 = vpop.permute.xlu0 %880
    %v883 = vsel %vm185, %v881, 0
    %v886 = vsel %vm263, %v828, 0
    %888 = vmatprep.subr.bf16.mxu0 0
    %889 = vmatpush1.bf16.msra.mxu0 %v886
    %890 = vmatprep.subr.bf16.mxu0 0
    %891 = vmatpush1.bf16.msra.mxu0 0
    %892 = vmatprep.subr.bf16.mxu0 0
    %893 = vmatpush1.bf16.msra.mxu0 0
    %894 = vmatprep.subr.bf16.mxu0 0
    %895 = vmatpush1.bf16.msra.mxu0 0
    %896 = vmatprep.subr.bf16.mxu0 0
    %897 = vmatpush1.bf16.msra.mxu0 0
    %898 = vmatprep.subr.bf16.mxu0 0
    %899 = vmatpush1.bf16.msra.mxu0 0
    %900 = vmatprep.subr.bf16.mxu0 0
    %901 = vmatpush1.bf16.msra.mxu0 0
    %902 = vmatprep.subr.bf16.mxu0 0
    %903 = vmatpush1.bf16.msra.mxu0 0
    %904 = vmatprep.subr.bf16.mxu0 0
    %905 = vmatpush1.bf16.msra.mxu0 0
    %906 = vmatprep.subr.bf16.mxu0 0
    %907 = vmatpush1.bf16.msra.mxu0 0
    %908 = vmatprep.subr.bf16.mxu0 0
    %909 = vmatpush1.bf16.msra.mxu0 0
    %910 = vmatprep.subr.bf16.mxu0 0
    %911 = vmatpush1.bf16.msra.mxu0 0
    %912 = vmatprep.subr.bf16.mxu0 0
    %913 = vmatpush1.bf16.msra.mxu0 0
    %914 = vmatprep.subr.bf16.mxu0 0
    %915 = vmatpush1.bf16.msra.mxu0 0
    %916 = vmatprep.subr.bf16.mxu0 0
    %917 = vmatpush1.bf16.msra.mxu0 0
    %918 = vmatprep.subr.bf16.mxu0 0
    %919 = vmatpush1.bf16.msra.mxu0 0
    %920 = vmatprep.mubr.bf16.mxu0 0
    %921 = vmatmul.mubr.bf16.gmra.mrb[0].mxu0 %v883
    %v922 = vpop.f32.mrb[0].mxu0
    %v923 = vadd.f32 0.0, %v922
    %v924 = vpop.f32.mrb[0].mxu0
    %v925 = vpop.f32.mrb[0].mxu0
    %v926 = vadd.f32 0.0, %v925
    %v927 = vpop.f32.mrb[0].mxu0
    %928 = vdwg.mxu0
    %v929 = vsel %vm475, %v873, -inf
    %930 = vmax.xlane.f32.xlu0 %v929
    %v931 = vpop.xlane.xlu0 %930
    %v932 = vsel %vm475, %v876, -inf
    %933 = vmax.xlane.f32.xlu0 %v932
    %v934 = vpop.xlane.xlu0 %933
    %v935 = vsel %vm475, %v923, -inf
    %936 = vmax.xlane.f32.xlu0 %v935
    %v937 = vpop.xlane.xlu0 %936
    %v938 = vsel %vm475, %v926, -inf
    %939 = vmax.xlane.f32.xlu0 %v938
    %v940 = vpop.xlane.xlu0 %939
    %v941 = vsub.f32 %v873, %v931
    %v942 = vsub.f32 %v876, %v934
    %v943 = vsub.f32 %v923, %v937
    %v944 = vsub.f32 %v926, %v940
    %v945 = vmul.f32 %v941, 1.442695
    %v946 = vpow.pop %v945
    %v947 = vmul.f32 %v942, 1.442695
    %v948 = vpow.pop %v947
    %v949 = vmul.f32 %v943, 1.442695
    %v950 = vpow.pop %v949
    %v951 = vmul.f32 %v944, 1.442695
    %v952 = vpow.pop %v951
    %v953 = vsel %vm475, %v946, 0.0
    %954 = vadd.xlane.f32.xlu0 %v953
    %v955 = vpop.xlane.xlu0 %954
    %v956 = vsel %vm475, %v948, 0.0
    %957 = vadd.xlane.f32.xlu0 %v956
    %v958 = vpop.xlane.xlu0 %957
    %v959 = vsel %vm475, %v950, 0.0
    %960 = vadd.xlane.f32.xlu0 %v959
    %v961 = vpop.xlane.xlu0 %960
    %v962 = vsel %vm475, %v952, 0.0
    %963 = vadd.xlane.f32.xlu0 %v962
    %v964 = vpop.xlane.xlu0 %963
    %v965 = vrcp.pop %v955
    %v966 = vmul.f32 %v946, %v965
    %v967 = vrcp.pop %v958
    %v968 = vmul.f32 %v948, %v967
    %v969 = vrcp.pop %v961
    %v970 = vmul.f32 %v950, %v969
    %v971 = vrcp.pop %v964
    %v972 = vmul.f32 %v952, %v971
    %s973 = scalar_lea.vmem [#allocation12], 16
    %974 = vst.msk [vmem:[%s973] sm:$0xff] %vm475, %v966
    %975 = vst.msk [vmem:[%s973 + $0x8] sm:$0xff] %vm475, %v968
    %976 = vst.msk [vmem:[%s973 + $0x40] sm:$0xff] %vm475, %v970
    %977 = vst.msk [vmem:[%s973 + $0x48] sm:$0xff] %vm475, %v972
    %v978 = vpack.c.bf16 %v968, %v966
    %v979 = vpack.c.bf16 %v972, %v970
    %v982 = vsel %vm475, %v978, 0
    %984 = vmatprep.subr.bf16.mxu0 0
    %985 = vmatpush1.bf16.msra.mxu0 %v831
    %986 = vmatprep.subr.bf16.mxu0 0
    %987 = vmatpush1.bf16.msra.mxu0 0
    %988 = vmatprep.subr.bf16.mxu0 0
    %989 = vmatpush1.bf16.msra.mxu0 0
    %990 = vmatprep.subr.bf16.mxu0 0
    %991 = vmatpush1.bf16.msra.mxu0 0
    %992 = vmatprep.subr.bf16.mxu0 0
    %993 = vmatpush1.bf16.msra.mxu0 0
    %994 = vmatprep.subr.bf16.mxu0 0
    %995 = vmatpush1.bf16.msra.mxu0 0
    %996 = vmatprep.subr.bf16.mxu0 0
    %997 = vmatpush1.bf16.msra.mxu0 0
    %998 = vmatprep.subr.bf16.mxu0 0
    %999 = vmatpush1.bf16.msra.mxu0 0
    %1000 = vmatprep.subr.bf16.mxu0 0
    %1001 = vmatpush1.bf16.msra.mxu0 0
    %1002 = vmatprep.subr.bf16.mxu0 0
    %1003 = vmatpush1.bf16.msra.mxu0 0
    %1004 = vmatprep.subr.bf16.mxu0 0
    %1005 = vmatpush1.bf16.msra.mxu0 0
    %1006 = vmatprep.subr.bf16.mxu0 0
    %1007 = vmatpush1.bf16.msra.mxu0 0
    %1008 = vmatprep.subr.bf16.mxu0 0
    %1009 = vmatpush1.bf16.msra.mxu0 0
    %1010 = vmatprep.subr.bf16.mxu0 0
    %1011 = vmatpush1.bf16.msra.mxu0 0
    %1012 = vmatprep.subr.bf16.mxu0 0
    %1013 = vmatpush1.bf16.msra.mxu0 0
    %1014 = vmatprep.subr.bf16.mxu0 0
    %1015 = vmatpush1.bf16.msra.mxu0 0
    %1016 = vmatprep.mubr.bf16.mxu0 0
    %1017 = vmatmul.mubr.bf16.gmra.mrb[0].mxu0 %v982
    %v1018 = vpop.f32.mrb[0].mxu0
    %v1019 = vadd.f32 0.0, %v1018
    %v1020 = vpop.f32.mrb[0].mxu0
    %v1021 = vpop.f32.mrb[0].mxu0
    %v1022 = vadd.f32 0.0, %v1021
    %v1023 = vpop.f32.mrb[0].mxu0
    %1024 = vdwg.mxu0
    %v1027 = vsel %vm475, %v979, 0
    %1029 = vmatprep.subr.bf16.mxu0 0
    %1030 = vmatpush1.bf16.msra.mxu0 %v881
    %1031 = vmatprep.subr.bf16.mxu0 0
    %1032 = vmatpush1.bf16.msra.mxu0 0
    %1033 = vmatprep.subr.bf16.mxu0 0
    %1034 = vmatpush1.bf16.msra.mxu0 0
    %1035 = vmatprep.subr.bf16.mxu0 0
    %1036 = vmatpush1.bf16.msra.mxu0 0
    %1037 = vmatprep.subr.bf16.mxu0 0
    %1038 = vmatpush1.bf16.msra.mxu0 0
    %1039 = vmatprep.subr.bf16.mxu0 0
    %1040 = vmatpush1.bf16.msra.mxu0 0
    %1041 = vmatprep.subr.bf16.mxu0 0
    %1042 = vmatpush1.bf16.msra.mxu0 0
    %1043 = vmatprep.subr.bf16.mxu0 0
    %1044 = vmatpush1.bf16.msra.mxu0 0
    %1045 = vmatprep.subr.bf16.mxu0 0
    %1046 = vmatpush1.bf16.msra.mxu0 0
    %1047 = vmatprep.subr.bf16.mxu0 0
    %1048 = vmatpush1.bf16.msra.mxu0 0
    %1049 = vmatprep.subr.bf16.mxu0 0
    %1050 = vmatpush1.bf16.msra.mxu0 0
    %1051 = vmatprep.subr.bf16.mxu0 0
    %1052 = vmatpush1.bf16.msra.mxu0 0
    %1053 = vmatprep.subr.bf16.mxu0 0
    %1054 = vmatpush1.bf16.msra.mxu0 0
    %1055 = vmatprep.subr.bf16.mxu0 0
    %1056 = vmatpush1.bf16.msra.mxu0 0
    %1057 = vmatprep.subr.bf16.mxu0 0
    %1058 = vmatpush1.bf16.msra.mxu0 0
    %1059 = vmatprep.subr.bf16.mxu0 0
    %1060 = vmatpush1.bf16.msra.mxu0 0
    %1061 = vmatprep.mubr.bf16.mxu0 0
    %1062 = vmatmul.mubr.bf16.gmra.mrb[0].mxu0 %v1027
    %v1063 = vpop.f32.mrb[0].mxu0
    %v1064 = vadd.f32 0.0, %v1063
    %v1065 = vpop.f32.mrb[0].mxu0
    %v1066 = vpop.f32.mrb[0].mxu0
    %v1067 = vadd.f32 0.0, %v1066
    %v1068 = vpop.f32.mrb[0].mxu0
    %1069 = vdwg.mxu0
    %v1070 = vpack.c.bf16 %v1022, %v1019
    %v1071 = vpack.c.bf16 %v1067, %v1064
    %vm1072 = vcmask 195712
    %v1073 = vsel %vm1072, %v171, -inf
    %1074 = vmax.xlane.f32.xlu0 %v1073
    %v1075 = vpop.xlane.xlu0 %1074
    %v1076 = vsel %vm1072, %v174, -inf
    %1077 = vmax.xlane.f32.xlu0 %v1076
    %v1078 = vpop.xlane.xlu0 %1077
    %v1079 = vsel %vm1072, %v179, -inf
    %1080 = vmax.xlane.f32.xlu0 %v1079
    %v1081 = vpop.xlane.xlu0 %1080
    %v1082 = vsel %vm1072, %v182, -inf
    %1083 = vmax.xlane.f32.xlu0 %v1082
    %v1084 = vpop.xlane.xlu0 %1083
    %v1085 = vsub.f32 %v171, %v1075
    %v1086 = vsub.f32 %v174, %v1078
    %v1087 = vsub.f32 %v179, %v1081
    %v1088 = vsub.f32 %v182, %v1084
    %v1089 = vmul.f32 %v1085, 1.442695
    %v1090 = vpow.pop %v1089
    %v1091 = vmul.f32 %v1086, 1.442695
    %v1092 = vpow.pop %v1091
    %v1093 = vmul.f32 %v1087, 1.442695
    %v1094 = vpow.pop %v1093
    %v1095 = vmul.f32 %v1088, 1.442695
    %v1096 = vpow.pop %v1095
    %1101 = vrot.lane.b32.xlu0 %v1090, 112
    %v1102 = vpop.permute.xlu0 %1101
    %1103 = vrot.lane.b32.xlu0 %v1092, 112
    %v1104 = vpop.permute.xlu0 %1103
    %1105 = vrot.lane.b32.xlu0 %v1094, 112
    %v1106 = vpop.permute.xlu0 %1105
    %1107 = vrot.lane.b32.xlu0 %v1096, 112
    %v1108 = vpop.permute.xlu0 %1107
    %v1113 = vsel %vm185, %v1102, 0.0
    %1114 = vadd.xlane.f32.xlu0 %v1113
    %v1115 = vpop.xlane.xlu0 %1114
    %v1116 = vsel %vm185, %v1104, 0.0
    %1117 = vadd.xlane.f32.xlu0 %v1116
    %v1118 = vpop.xlane.xlu0 %1117
    %v1119 = vsel %vm185, %v1106, 0.0
    %1120 = vadd.xlane.f32.xlu0 %v1119
    %v1121 = vpop.xlane.xlu0 %1120
    %v1122 = vsel %vm185, %v1108, 0.0
    %1123 = vadd.xlane.f32.xlu0 %v1122
    %v1124 = vpop.xlane.xlu0 %1123
    %v1125 = vrcp.pop %v1115
    %v1126 = vrcp.pop %v1118
    %v1127 = vrcp.pop %v1121
    %v1128 = vrcp.pop %v1124
    %v1129 = vmul.f32 %v1090, %v1125
    %v1130 = vmul.f32 %v1092, %v1126
    %v1131 = vmul.f32 %v1094, %v1127
    %v1132 = vmul.f32 %v1096, %v1128
    %v1133 = vpack.c.bf16 %v1130, %v1129
    %v1134 = vpack.c.bf16 %v1132, %v1131
    %v1135 = vsel %vm1072, %v1129, 0.0
    %v1136 = vsel %vm1072, %v1130, 0.0
    %v1137 = vadd.f32 %v1135, %v1136
    %v1138 = vrot.slane %v1137, 4
    %v1139 = vadd.f32 %v1137, %v1138
    %v1140 = vrot.slane %v1139, 2
    %v1141 = vadd.f32 %v1139, %v1140
    %v1142 = vrot.slane %v1141, 1
    %v1143 = vadd.f32 %v1141, %v1142
    %v1144 = vsel %vm1072, %v1131, 0.0
    %v1145 = vsel %vm1072, %v1132, 0.0
    %v1146 = vadd.f32 %v1144, %v1145
    %v1147 = vrot.slane %v1146, 4
    %v1148 = vadd.f32 %v1146, %v1147
    %v1149 = vrot.slane %v1148, 2
    %v1150 = vadd.f32 %v1148, %v1149
    %v1151 = vrot.slane %v1150, 1
    %v1152 = vadd.f32 %v1150, %v1151
    %v1153 = vpack.c.bf16 %v1143, %v1143
    %v1154 = vpack.c.bf16 %v1152, %v1152
    %s1155 = scalar_lea.vmem [#allocation8], 8
    %v1156 = vld [vmem:[%s1155] sm:$0xf]
    %v1159 = vunpack.c.l.b16 %v1153
    %v1160 = vunpack.c.l.b16 %v1154
    %v1161 = vsel %vm257, %v1160, %v1159
    %v1162 = vpack.c.b16 %v1161, %v1161
    %1163 = vrot.lane.b32.xlu0 %v1162, 112
    %v1164 = vpop.permute.xlu0 %1163
    %v1166 = vsel %vm185, %v1164, 0
    %v1169 = vsel %vm263, %v1156, 0
    %1171 = vmatprep.subr.bf16.mxu0 0
    %1172 = vmatpush1.bf16.msra.mxu0 %v1169
    %1173 = vmatprep.subr.bf16.mxu0 0
    %1174 = vmatpush1.bf16.msra.mxu0 0
    %1175 = vmatprep.subr.bf16.mxu0 0
    %1176 = vmatpush1.bf16.msra.mxu0 0
    %1177 = vmatprep.subr.bf16.mxu0 0
    %1178 = vmatpush1.bf16.msra.mxu0 0
    %1179 = vmatprep.subr.bf16.mxu0 0
    %1180 = vmatpush1.bf16.msra.mxu0 0
    %1181 = vmatprep.subr.bf16.mxu0 0
    %1182 = vmatpush1.bf16.msra.mxu0 0
    %1183 = vmatprep.subr.bf16.mxu0 0
    %1184 = vmatpush1.bf16.msra.mxu0 0
    %1185 = vmatprep.subr.bf16.mxu0 0
    %1186 = vmatpush1.bf16.msra.mxu0 0
    %1187 = vmatprep.subr.bf16.mxu0 0
    %1188 = vmatpush1.bf16.msra.mxu0 0
    %1189 = vmatprep.subr.bf16.mxu0 0
    %1190 = vmatpush1.bf16.msra.mxu0 0
    %1191 = vmatprep.subr.bf16.mxu0 0
    %1192 = vmatpush1.bf16.msra.mxu0 0
    %1193 = vmatprep.subr.bf16.mxu0 0
    %1194 = vmatpush1.bf16.msra.mxu0 0
    %1195 = vmatprep.subr.bf16.mxu0 0
    %1196 = vmatpush1.bf16.msra.mxu0 0
    %1197 = vmatprep.subr.bf16.mxu0 0
    %1198 = vmatpush1.bf16.msra.mxu0 0
    %1199 = vmatprep.subr.bf16.mxu0 0
    %1200 = vmatpush1.bf16.msra.mxu0 0
    %1201 = vmatprep.subr.bf16.mxu0 0
    %1202 = vmatpush1.bf16.msra.mxu0 0
    %1203 = vmatprep.mubr.bf16.mxu0 0
    %1204 = vmatmul.mubr.bf16.gmra.mrb[0].mxu0 %v1166
    %v1205 = vpop.f32.mrb[0].mxu0
    %v1206 = vadd.f32 0.0, %v1205
    %v1207 = vpop.f32.mrb[0].mxu0
    %v1208 = vpop.f32.mrb[0].mxu0
    %v1209 = vpop.f32.mrb[0].mxu0
    %1210 = vdwg.mxu0
    %1212 = vrot.lane.b32.xlu0 %v1206, 112
    %v1213 = vpop.permute.xlu0 %1212
    %1215 = vrot.lane.b32.xlu0 %v1206, 96
    %v1216 = vpop.permute.xlu0 %1215
    %1218 = vrot.lane.b32.xlu0 %v1206, 80
    %v1219 = vpop.permute.xlu0 %1218
    %1221 = vrot.lane.b32.xlu0 %v1206, 64
    %v1222 = vpop.permute.xlu0 %1221
    %1224 = vrot.lane.b32.xlu0 %v1206, 48
    %v1225 = vpop.permute.xlu0 %1224
    %1227 = vrot.lane.b32.xlu0 %v1206, 32
    %v1228 = vpop.permute.xlu0 %1227
    %1230 = vrot.lane.b32.xlu0 %v1206, 16
    %v1231 = vpop.permute.xlu0 %1230
    %v1233 = vcombine.low %v1206, %v1216
    %v1235 = vunpack.c.l.s4 1983009808
    %v1236 = vunpack.c.0.s8 %v1235
    %v1237 = vlaneseq
    %v1238 = vshrl.u32 %v1237, 7
    %v1239 = vsub.s32 %v1236, %v1238
    %v1240 = vrot.slane %v1233, %v1239
    %v1241 = vcombine.low %v1213, %v1219
    %v1243 = vunpack.c.l.s4 1983009808
    %v1244 = vunpack.c.0.s8 %v1243
    %v1245 = vlaneseq
    %v1246 = vshrl.u32 %v1245, 7
    %v1247 = vsub.s32 %v1244, %v1246
    %v1248 = vrot.slane %v1241, %v1247
    %v1249 = vcombine.low %v1222, %v1228
    %v1251 = vunpack.c.l.s4 1983009808
    %v1252 = vunpack.c.0.s8 %v1251
    %v1253 = vlaneseq
    %v1254 = vshrl.u32 %v1253, 7
    %v1255 = vsub.s32 %v1252, %v1254
    %v1256 = vrot.slane %v1249, %v1255
    %v1257 = vcombine.low %v1225, %v1231
    %v1259 = vunpack.c.l.s4 1983009808
    %v1260 = vunpack.c.0.s8 %v1259
    %v1261 = vlaneseq
    %v1262 = vshrl.u32 %v1261, 7
    %v1263 = vsub.s32 %v1260, %v1262
    %v1264 = vrot.slane %v1257, %v1263
    %v1265 = vcombine.low %v1240, %v1248
    %v1267 = vunpack.c.l.s4 1934713408
    %v1268 = vunpack.c.0.s8 %v1267
    %v1269 = vlaneseq
    %v1270 = vshrl.u32 %v1269, 7
    %v1271 = vsub.s32 %v1268, %v1270
    %v1272 = vrot.slane %v1265, %v1271
    %v1273 = vcombine.low %v1256, %v1264
    %v1275 = vunpack.c.l.s4 1934713408
    %v1276 = vunpack.c.0.s8 %v1275
    %v1277 = vlaneseq
    %v1278 = vshrl.u32 %v1277, 7
    %v1279 = vsub.s32 %v1276, %v1278
    %v1280 = vrot.slane %v1273, %v1279
    %v1281 = vcombine.low %v1272, %v1280
    %v1282 = vcombine.high %v1272, %v1280
    %v1283 = vpack.c.bf16 %v1281, %v1281
    %v1284 = vpack.c.bf16 %v1282, %v1282
    %1286 = vrot.lane.b32.xlu0 %v1133, 112
    %v1287 = vpop.permute.xlu0 %1286
    %v1289 = vsel %vm185, %v1287, 0
    %v1292 = vsel %vm263, %v1283, 0
    %1294 = vmatprep.subr.bf16.mxu0 0
    %1295 = vmatpush1.bf16.msra.mxu0 %v1292
    %1296 = vmatprep.subr.bf16.mxu0 0
    %1297 = vmatpush1.bf16.msra.mxu0 0
    %1298 = vmatprep.subr.bf16.mxu0 0
    %1299 = vmatpush1.bf16.msra.mxu0 0
    %1300 = vmatprep.subr.bf16.mxu0 0
    %1301 = vmatpush1.bf16.msra.mxu0 0
    %1302 = vmatprep.subr.bf16.mxu0 0
    %1303 = vmatpush1.bf16.msra.mxu0 0
    %1304 = vmatprep.subr.bf16.mxu0 0
    %1305 = vmatpush1.bf16.msra.mxu0 0
    %1306 = vmatprep.subr.bf16.mxu0 0
    %1307 = vmatpush1.bf16.msra.mxu0 0
    %1308 = vmatprep.subr.bf16.mxu0 0
    %1309 = vmatpush1.bf16.msra.mxu0 0
    %1310 = vmatprep.subr.bf16.mxu0 0
    %1311 = vmatpush1.bf16.msra.mxu0 0
    %1312 = vmatprep.subr.bf16.mxu0 0
    %1313 = vmatpush1.bf16.msra.mxu0 0
    %1314 = vmatprep.subr.bf16.mxu0 0
    %1315 = vmatpush1.bf16.msra.mxu0 0
    %1316 = vmatprep.subr.bf16.mxu0 0
    %1317 = vmatpush1.bf16.msra.mxu0 0
    %1318 = vmatprep.subr.bf16.mxu0 0
    %1319 = vmatpush1.bf16.msra.mxu0 0
    %1320 = vmatprep.subr.bf16.mxu0 0
    %1321 = vmatpush1.bf16.msra.mxu0 0
    %1322 = vmatprep.subr.bf16.mxu0 0
    %1323 = vmatpush1.bf16.msra.mxu0 0
    %1324 = vmatprep.subr.bf16.mxu0 0
    %1325 = vmatpush1.bf16.msra.mxu0 0
    %1326 = vmatprep.mubr.bf16.mxu0 0
    %1327 = vmatmul.mubr.bf16.gmra.mrb[0].mxu0 %v1289
    %v1328 = vpop.f32.mrb[0].mxu0
    %v1329 = vadd.f32 0.0, %v1328
    %v1330 = vpop.f32.mrb[0].mxu0
    %v1331 = vpop.f32.mrb[0].mxu0
    %v1332 = vadd.f32 0.0, %v1331
    %v1333 = vpop.f32.mrb[0].mxu0
    %1334 = vdwg.mxu0
    %1336 = vrot.lane.b32.xlu0 %v1134, 112
    %v1337 = vpop.permute.xlu0 %1336
    %v1339 = vsel %vm185, %v1337, 0
    %v1342 = vsel %vm263, %v1284, 0
    %1344 = vmatprep.subr.bf16.mxu0 0
    %1345 = vmatpush1.bf16.msra.mxu0 %v1342
    %1346 = vmatprep.subr.bf16.mxu0 0
    %1347 = vmatpush1.bf16.msra.mxu0 0
    %1348 = vmatprep.subr.bf16.mxu0 0
    %1349 = vmatpush1.bf16.msra.mxu0 0
    %1350 = vmatprep.subr.bf16.mxu0 0
    %1351 = vmatpush1.bf16.msra.mxu0 0
    %1352 = vmatprep.subr.bf16.mxu0 0
    %1353 = vmatpush1.bf16.msra.mxu0 0
    %1354 = vmatprep.subr.bf16.mxu0 0
    %1355 = vmatpush1.bf16.msra.mxu0 0
    %1356 = vmatprep.subr.bf16.mxu0 0
    %1357 = vmatpush1.bf16.msra.mxu0 0
    %1358 = vmatprep.subr.bf16.mxu0 0
    %1359 = vmatpush1.bf16.msra.mxu0 0
    %1360 = vmatprep.subr.bf16.mxu0 0
    %1361 = vmatpush1.bf16.msra.mxu0 0
    %1362 = vmatprep.subr.bf16.mxu0 0
    %1363 = vmatpush1.bf16.msra.mxu0 0
    %1364 = vmatprep.subr.bf16.mxu0 0
    %1365 = vmatpush1.bf16.msra.mxu0 0
    %1366 = vmatprep.subr.bf16.mxu0 0
    %1367 = vmatpush1.bf16.msra.mxu0 0
    %1368 = vmatprep.subr.bf16.mxu0 0
    %1369 = vmatpush1.bf16.msra.mxu0 0
    %1370 = vmatprep.subr.bf16.mxu0 0
    %1371 = vmatpush1.bf16.msra.mxu0 0
    %1372 = vmatprep.subr.bf16.mxu0 0
    %1373 = vmatpush1.bf16.msra.mxu0 0
    %1374 = vmatprep.subr.bf16.mxu0 0
    %1375 = vmatpush1.bf16.msra.mxu0 0
    %1376 = vmatprep.mubr.bf16.mxu0 0
    %1377 = vmatmul.mubr.bf16.gmra.mrb[0].mxu0 %v1339
    %v1378 = vpop.f32.mrb[0].mxu0
    %v1379 = vadd.f32 0.0, %v1378
    %v1380 = vpop.f32.mrb[0].mxu0
    %v1381 = vpop.f32.mrb[0].mxu0
    %v1382 = vadd.f32 0.0, %v1381
    %v1383 = vpop.f32.mrb[0].mxu0
    %1384 = vdwg.mxu0
    %v1385 = vsel %vm475, %v1329, -inf
    %1386 = vmax.xlane.f32.xlu0 %v1385
    %v1387 = vpop.xlane.xlu0 %1386
    %v1388 = vsel %vm475, %v1332, -inf
    %1389 = vmax.xlane.f32.xlu0 %v1388
    %v1390 = vpop.xlane.xlu0 %1389
    %v1391 = vsel %vm475, %v1379, -inf
    %1392 = vmax.xlane.f32.xlu0 %v1391
    %v1393 = vpop.xlane.xlu0 %1392
    %v1394 = vsel %vm475, %v1382, -inf
    %1395 = vmax.xlane.f32.xlu0 %v1394
    %v1396 = vpop.xlane.xlu0 %1395
    %v1397 = vsub.f32 %v1329, %v1387
    %v1398 = vsub.f32 %v1332, %v1390
    %v1399 = vsub.f32 %v1379, %v1393
    %v1400 = vsub.f32 %v1382, %v1396
    %v1401 = vmul.f32 %v1397, 1.442695
    %v1402 = vpow.pop %v1401
    %v1403 = vmul.f32 %v1398, 1.442695
    %v1404 = vpow.pop %v1403
    %v1405 = vmul.f32 %v1399, 1.442695
    %v1406 = vpow.pop %v1405
    %v1407 = vmul.f32 %v1400, 1.442695
    %v1408 = vpow.pop %v1407
    %v1409 = vsel %vm475, %v1402, 0.0
    %1410 = vadd.xlane.f32.xlu0 %v1409
    %v1411 = vpop.xlane.xlu0 %1410
    %v1412 = vsel %vm475, %v1404, 0.0
    %1413 = vadd.xlane.f32.xlu0 %v1412
    %v1414 = vpop.xlane.xlu0 %1413
    %v1415 = vsel %vm475, %v1406, 0.0
    %1416 = vadd.xlane.f32.xlu0 %v1415
    %v1417 = vpop.xlane.xlu0 %1416
    %v1418 = vsel %vm475, %v1408, 0.0
    %1419 = vadd.xlane.f32.xlu0 %v1418
    %v1420 = vpop.xlane.xlu0 %1419
    %v1421 = vrcp.pop %v1411
    %v1422 = vmul.f32 %v1402, %v1421
    %v1423 = vrcp.pop %v1414
    %v1424 = vmul.f32 %v1404, %v1423
    %v1425 = vrcp.pop %v1417
    %v1426 = vmul.f32 %v1406, %v1425
    %v1427 = vrcp.pop %v1420
    %v1428 = vmul.f32 %v1408, %v1427
    %s1429 = scalar_lea.vmem [#allocation12], 32
    %1430 = vst.msk [vmem:[%s1429] sm:$0xff] %vm475, %v1422
    %1431 = vst.msk [vmem:[%s1429 + $0x8] sm:$0xff] %vm475, %v1424
    %1432 = vst.msk [vmem:[%s1429 + $0x40] sm:$0xff] %vm475, %v1426
    %1433 = vst.msk [vmem:[%s1429 + $0x48] sm:$0xff] %vm475, %v1428
    %v1434 = vpack.c.bf16 %v1424, %v1422
    %v1435 = vpack.c.bf16 %v1428, %v1426
    %v1438 = vsel %vm475, %v1434, 0
    %1440 = vmatprep.subr.bf16.mxu0 0
    %1441 = vmatpush1.bf16.msra.mxu0 %v1287
    %1442 = vmatprep.subr.bf16.mxu0 0
    %1443 = vmatpush1.bf16.msra.mxu0 0
    %1444 = vmatprep.subr.bf16.mxu0 0
    %1445 = vmatpush1.bf16.msra.mxu0 0
    %1446 = vmatprep.subr.bf16.mxu0 0
    %1447 = vmatpush1.bf16.msra.mxu0 0
    %1448 = vmatprep.subr.bf16.mxu0 0
    %1449 = vmatpush1.bf16.msra.mxu0 0
    %1450 = vmatprep.subr.bf16.mxu0 0
    %1451 = vmatpush1.bf16.msra.mxu0 0
    %1452 = vmatprep.subr.bf16.mxu0 0
    %1453 = vmatpush1.bf16.msra.mxu0 0
    %1454 = vmatprep.subr.bf16.mxu0 0
    %1455 = vmatpush1.bf16.msra.mxu0 0
    %1456 = vmatprep.subr.bf16.mxu0 0
    %1457 = vmatpush1.bf16.msra.mxu0 0
    %1458 = vmatprep.subr.bf16.mxu0 0
    %1459 = vmatpush1.bf16.msra.mxu0 0
    %1460 = vmatprep.subr.bf16.mxu0 0
    %1461 = vmatpush1.bf16.msra.mxu0 0
    %1462 = vmatprep.subr.bf16.mxu0 0
    %1463 = vmatpush1.bf16.msra.mxu0 0
    %1464 = vmatprep.subr.bf16.mxu0 0
    %1465 = vmatpush1.bf16.msra.mxu0 0
    %1466 = vmatprep.subr.bf16.mxu0 0
    %1467 = vmatpush1.bf16.msra.mxu0 0
    %1468 = vmatprep.subr.bf16.mxu0 0
    %1469 = vmatpush1.bf16.msra.mxu0 0
    %1470 = vmatprep.subr.bf16.mxu0 0
    %1471 = vmatpush1.bf16.msra.mxu0 0
    %1472 = vmatprep.mubr.bf16.mxu0 0
    %1473 = vmatmul.mubr.bf16.gmra.mrb[0].mxu0 %v1438
    %v1474 = vpop.f32.mrb[0].mxu0
    %v1475 = vadd.f32 0.0, %v1474
    %v1476 = vpop.f32.mrb[0].mxu0
    %v1477 = vpop.f32.mrb[0].mxu0
    %v1478 = vadd.f32 0.0, %v1477
    %v1479 = vpop.f32.mrb[0].mxu0
    %1480 = vdwg.mxu0
    %v1483 = vsel %vm475, %v1435, 0
    %1485 = vmatprep.subr.bf16.mxu0 0
    %1486 = vmatpush1.bf16.msra.mxu0 %v1337
    %1487 = vmatprep.subr.bf16.mxu0 0
    %1488 = vmatpush1.bf16.msra.mxu0 0
    %1489 = vmatprep.subr.bf16.mxu0 0
    %1490 = vmatpush1.bf16.msra.mxu0 0
    %1491 = vmatprep.subr.bf16.mxu0 0
    %1492 = vmatpush1.bf16.msra.mxu0 0
    %1493 = vmatprep.subr.bf16.mxu0 0
    %1494 = vmatpush1.bf16.msra.mxu0 0
    %1495 = vmatprep.subr.bf16.mxu0 0
    %1496 = vmatpush1.bf16.msra.mxu0 0
    %1497 = vmatprep.subr.bf16.mxu0 0
    %1498 = vmatpush1.bf16.msra.mxu0 0
    %1499 = vmatprep.subr.bf16.mxu0 0
    %1500 = vmatpush1.bf16.msra.mxu0 0
    %1501 = vmatprep.subr.bf16.mxu0 0
    %1502 = vmatpush1.bf16.msra.mxu0 0
    %1503 = vmatprep.subr.bf16.mxu0 0
    %1504 = vmatpush1.bf16.msra.mxu0 0
    %1505 = vmatprep.subr.bf16.mxu0 0
    %1506 = vmatpush1.bf16.msra.mxu0 0
    %1507 = vmatprep.subr.bf16.mxu0 0
    %1508 = vmatpush1.bf16.msra.mxu0 0
    %1509 = vmatprep.subr.bf16.mxu0 0
    %1510 = vmatpush1.bf16.msra.mxu0 0
    %1511 = vmatprep.subr.bf16.mxu0 0
    %1512 = vmatpush1.bf16.msra.mxu0 0
    %1513 = vmatprep.subr.bf16.mxu0 0
    %1514 = vmatpush1.bf16.msra.mxu0 0
    %1515 = vmatprep.subr.bf16.mxu0 0
    %1516 = vmatpush1.bf16.msra.mxu0 0
    %1517 = vmatprep.mubr.bf16.mxu0 0
    %1518 = vmatmul.mubr.bf16.gmra.mrb[0].mxu0 %v1483
    %v1519 = vpop.f32.mrb[0].mxu0
    %v1520 = vadd.f32 0.0, %v1519
    %v1521 = vpop.f32.mrb[0].mxu0
    %v1522 = vpop.f32.mrb[0].mxu0
    %v1523 = vadd.f32 0.0, %v1522
    %v1524 = vpop.f32.mrb[0].mxu0
    %1525 = vdwg.mxu0
    %v1526 = vpack.c.bf16 %v1478, %v1475
    %v1527 = vpack.c.bf16 %v1523, %v1520
    %vm1528 = vcmask 261312
    %v1529 = vsel %vm1528, %v171, -inf
    %1530 = vmax.xlane.f32.xlu0 %v1529
    %v1531 = vpop.xlane.xlu0 %1530
    %v1532 = vsel %vm1528, %v174, -inf
    %1533 = vmax.xlane.f32.xlu0 %v1532
    %v1534 = vpop.xlane.xlu0 %1533
    %v1535 = vsel %vm1528, %v179, -inf
    %1536 = vmax.xlane.f32.xlu0 %v1535
    %v1537 = vpop.xlane.xlu0 %1536
    %v1538 = vsel %vm1528, %v182, -inf
    %1539 = vmax.xlane.f32.xlu0 %v1538
    %v1540 = vpop.xlane.xlu0 %1539
    %v1541 = vsub.f32 %v171, %v1531
    %v1542 = vsub.f32 %v174, %v1534
    %v1543 = vsub.f32 %v179, %v1537
    %v1544 = vsub.f32 %v182, %v1540
    %v1545 = vmul.f32 %v1541, 1.442695
    %v1546 = vpow.pop %v1545
    %v1547 = vmul.f32 %v1542, 1.442695
    %v1548 = vpow.pop %v1547
    %v1549 = vmul.f32 %v1543, 1.442695
    %v1550 = vpow.pop %v1549
    %v1551 = vmul.f32 %v1544, 1.442695
    %v1552 = vpow.pop %v1551
    %1557 = vrot.lane.b32.xlu0 %v1546, 104
    %v1558 = vpop.permute.xlu0 %1557
    %1559 = vrot.lane.b32.xlu0 %v1548, 104
    %v1560 = vpop.permute.xlu0 %1559
    %1561 = vrot.lane.b32.xlu0 %v1550, 104
    %v1562 = vpop.permute.xlu0 %1561
    %1563 = vrot.lane.b32.xlu0 %v1552, 104
    %v1564 = vpop.permute.xlu0 %1563
    %v1569 = vsel %vm185, %v1558, 0.0
    %1570 = vadd.xlane.f32.xlu0 %v1569
    %v1571 = vpop.xlane.xlu0 %1570
    %v1572 = vsel %vm185, %v1560, 0.0
    %1573 = vadd.xlane.f32.xlu0 %v1572
    %v1574 = vpop.xlane.xlu0 %1573
    %v1575 = vsel %vm185, %v1562, 0.0
    %1576 = vadd.xlane.f32.xlu0 %v1575
    %v1577 = vpop.xlane.xlu0 %1576
    %v1578 = vsel %vm185, %v1564, 0.0
    %1579 = vadd.xlane.f32.xlu0 %v1578
    %v1580 = vpop.xlane.xlu0 %1579
    %v1581 = vrcp.pop %v1571
    %v1582 = vrcp.pop %v1574
    %v1583 = vrcp.pop %v1577
    %v1584 = vrcp.pop %v1580
    %v1585 = vmul.f32 %v1546, %v1581
    %v1586 = vmul.f32 %v1548, %v1582
    %v1587 = vmul.f32 %v1550, %v1583
    %v1588 = vmul.f32 %v1552, %v1584
    %v1589 = vpack.c.bf16 %v1586, %v1585
    %v1590 = vpack.c.bf16 %v1588, %v1587
    %v1591 = vsel %vm1528, %v1585, 0.0
    %v1592 = vsel %vm1528, %v1586, 0.0
    %v1593 = vadd.f32 %v1591, %v1592
    %v1594 = vrot.slane %v1593, 4
    %v1595 = vadd.f32 %v1593, %v1594
    %v1596 = vrot.slane %v1595, 2
    %v1597 = vadd.f32 %v1595, %v1596
    %v1598 = vrot.slane %v1597, 1
    %v1599 = vadd.f32 %v1597, %v1598
    %v1600 = vsel %vm1528, %v1587, 0.0
    %v1601 = vsel %vm1528, %v1588, 0.0
    %v1602 = vadd.f32 %v1600, %v1601
    %v1603 = vrot.slane %v1602, 4
    %v1604 = vadd.f32 %v1602, %v1603
    %v1605 = vrot.slane %v1604, 2
    %v1606 = vadd.f32 %v1604, %v1605
    %v1607 = vrot.slane %v1606, 1
    %v1608 = vadd.f32 %v1606, %v1607
    %v1609 = vpack.c.bf16 %v1599, %v1599
    %v1610 = vpack.c.bf16 %v1608, %v1608
    %s1611 = scalar_lea.vmem [#allocation8], 12
    %v1612 = vld [vmem:[%s1611] sm:$0xf]
    %v1615 = vunpack.c.l.b16 %v1609
    %v1616 = vunpack.c.l.b16 %v1610
    %v1617 = vsel %vm257, %v1616, %v1615
    %v1618 = vpack.c.b16 %v1617, %v1617
    %1619 = vrot.lane.b32.xlu0 %v1618, 104
    %v1620 = vpop.permute.xlu0 %1619
    %v1622 = vsel %vm185, %v1620, 0
    %v1625 = vsel %vm263, %v1612, 0
    %1627 = vmatprep.subr.bf16.mxu0 0
    %1628 = vmatpush1.bf16.msra.mxu0 %v1625
    %1629 = vmatprep.subr.bf16.mxu0 0
    %1630 = vmatpush1.bf16.msra.mxu0 0
    %1631 = vmatprep.subr.bf16.mxu0 0
    %1632 = vmatpush1.bf16.msra.mxu0 0
    %1633 = vmatprep.subr.bf16.mxu0 0
    %1634 = vmatpush1.bf16.msra.mxu0 0
    %1635 = vmatprep.subr.bf16.mxu0 0
    %1636 = vmatpush1.bf16.msra.mxu0 0
    %1637 = vmatprep.subr.bf16.mxu0 0
    %1638 = vmatpush1.bf16.msra.mxu0 0
    %1639 = vmatprep.subr.bf16.mxu0 0
    %1640 = vmatpush1.bf16.msra.mxu0 0
    %1641 = vmatprep.subr.bf16.mxu0 0
    %1642 = vmatpush1.bf16.msra.mxu0 0
    %1643 = vmatprep.subr.bf16.mxu0 0
    %1644 = vmatpush1.bf16.msra.mxu0 0
    %1645 = vmatprep.subr.bf16.mxu0 0
    %1646 = vmatpush1.bf16.msra.mxu0 0
    %1647 = vmatprep.subr.bf16.mxu0 0
    %1648 = vmatpush1.bf16.msra.mxu0 0
    %1649 = vmatprep.subr.bf16.mxu0 0
    %1650 = vmatpush1.bf16.msra.mxu0 0
    %1651 = vmatprep.subr.bf16.mxu0 0
    %1652 = vmatpush1.bf16.msra.mxu0 0
    %1653 = vmatprep.subr.bf16.mxu0 0
    %1654 = vmatpush1.bf16.msra.mxu0 0
    %1655 = vmatprep.subr.bf16.mxu0 0
    %1656 = vmatpush1.bf16.msra.mxu0 0
    %1657 = vmatprep.subr.bf16.mxu0 0
    %1658 = vmatpush1.bf16.msra.mxu0 0
    %1659 = vmatprep.mubr.bf16.mxu0 0
    %1660 = vmatmul.mubr.bf16.gmra.mrb[0].mxu0 %v1622
    %v1661 = vpop.f32.mrb[0].mxu0
    %v1662 = vadd.f32 0.0, %v1661
    %v1663 = vpop.f32.mrb[0].mxu0
    %v1664 = vpop.f32.mrb[0].mxu0
    %v1665 = vpop.f32.mrb[0].mxu0
    %1666 = vdwg.mxu0
    %1668 = vrot.lane.b32.xlu0 %v1662, 112
    %v1669 = vpop.permute.xlu0 %1668
    %1671 = vrot.lane.b32.xlu0 %v1662, 96
    %v1672 = vpop.permute.xlu0 %1671
    %1674 = vrot.lane.b32.xlu0 %v1662, 80
    %v1675 = vpop.permute.xlu0 %1674
    %1677 = vrot.lane.b32.xlu0 %v1662, 64
    %v1678 = vpop.permute.xlu0 %1677
    %1680 = vrot.lane.b32.xlu0 %v1662, 48
    %v1681 = vpop.permute.xlu0 %1680
    %1683 = vrot.lane.b32.xlu0 %v1662, 32
    %v1684 = vpop.permute.xlu0 %1683
    %1686 = vrot.lane.b32.xlu0 %v1662, 16
    %v1687 = vpop.permute.xlu0 %1686
    %v1689 = vcombine.low %v1662, %v1672
    %v1691 = vunpack.c.l.s4 1983009808
    %v1692 = vunpack.c.0.s8 %v1691
    %v1693 = vlaneseq
    %v1694 = vshrl.u32 %v1693, 7
    %v1695 = vsub.s32 %v1692, %v1694
    %v1696 = vrot.slane %v1689, %v1695
    %v1697 = vcombine.low %v1669, %v1675
    %v1699 = vunpack.c.l.s4 1983009808
    %v1700 = vunpack.c.0.s8 %v1699
    %v1701 = vlaneseq
    %v1702 = vshrl.u32 %v1701, 7
    %v1703 = vsub.s32 %v1700, %v1702
    %v1704 = vrot.slane %v1697, %v1703
    %v1705 = vcombine.low %v1678, %v1684
    %v1707 = vunpack.c.l.s4 1983009808
    %v1708 = vunpack.c.0.s8 %v1707
    %v1709 = vlaneseq
    %v1710 = vshrl.u32 %v1709, 7
    %v1711 = vsub.s32 %v1708, %v1710
    %v1712 = vrot.slane %v1705, %v1711
    %v1713 = vcombine.low %v1681, %v1687
    %v1715 = vunpack.c.l.s4 1983009808
    %v1716 = vunpack.c.0.s8 %v1715
    %v1717 = vlaneseq
    %v1718 = vshrl.u32 %v1717, 7
    %v1719 = vsub.s32 %v1716, %v1718
    %v1720 = vrot.slane %v1713, %v1719
    %v1721 = vcombine.low %v1696, %v1704
    %v1723 = vunpack.c.l.s4 1934713408
    %v1724 = vunpack.c.0.s8 %v1723
    %v1725 = vlaneseq
    %v1726 = vshrl.u32 %v1725, 7
    %v1727 = vsub.s32 %v1724, %v1726
    %v1728 = vrot.slane %v1721, %v1727
    %v1729 = vcombine.low %v1712, %v1720
    %v1731 = vunpack.c.l.s4 1934713408
    %v1732 = vunpack.c.0.s8 %v1731
    %v1733 = vlaneseq
    %v1734 = vshrl.u32 %v1733, 7
    %v1735 = vsub.s32 %v1732, %v1734
    %v1736 = vrot.slane %v1729, %v1735
    %v1737 = vcombine.low %v1728, %v1736
    %v1738 = vcombine.high %v1728, %v1736
    %v1739 = vpack.c.bf16 %v1737, %v1737
    %v1740 = vpack.c.bf16 %v1738, %v1738
    %1742 = vrot.lane.b32.xlu0 %v1589, 104
    %v1743 = vpop.permute.xlu0 %1742
    %v1745 = vsel %vm185, %v1743, 0
    %v1748 = vsel %vm263, %v1739, 0
    %1750 = vmatprep.subr.bf16.mxu0 0
    %1751 = vmatpush1.bf16.msra.mxu0 %v1748
    %1752 = vmatprep.subr.bf16.mxu0 0
    %1753 = vmatpush1.bf16.msra.mxu0 0
    %1754 = vmatprep.subr.bf16.mxu0 0
    %1755 = vmatpush1.bf16.msra.mxu0 0
    %1756 = vmatprep.subr.bf16.mxu0 0
    %1757 = vmatpush1.bf16.msra.mxu0 0
    %1758 = vmatprep.subr.bf16.mxu0 0
    %1759 = vmatpush1.bf16.msra.mxu0 0
    %1760 = vmatprep.subr.bf16.mxu0 0
    %1761 = vmatpush1.bf16.msra.mxu0 0
    %1762 = vmatprep.subr.bf16.mxu0 0
    %1763 = vmatpush1.bf16.msra.mxu0 0
    %1764 = vmatprep.subr.bf16.mxu0 0
    %1765 = vmatpush1.bf16.msra.mxu0 0
    %1766 = vmatprep.subr.bf16.mxu0 0
    %1767 = vmatpush1.bf16.msra.mxu0 0
    %1768 = vmatprep.subr.bf16.mxu0 0
    %1769 = vmatpush1.bf16.msra.mxu0 0
    %1770 = vmatprep.subr.bf16.mxu0 0
    %1771 = vmatpush1.bf16.msra.mxu0 0
    %1772 = vmatprep.subr.bf16.mxu0 0
    %1773 = vmatpush1.bf16.msra.mxu0 0
    %1774 = vmatprep.subr.bf16.mxu0 0
    %1775 = vmatpush1.bf16.msra.mxu0 0
    %1776 = vmatprep.subr.bf16.mxu0 0
    %1777 = vmatpush1.bf16.msra.mxu0 0
    %1778 = vmatprep.subr.bf16.mxu0 0
    %1779 = vmatpush1.bf16.msra.mxu0 0
    %1780 = vmatprep.subr.bf16.mxu0 0
    %1781 = vmatpush1.bf16.msra.mxu0 0
    %1782 = vmatprep.mubr.bf16.mxu0 0
    %1783 = vmatmul.mubr.bf16.gmra.mrb[0].mxu0 %v1745
    %v1784 = vpop.f32.mrb[0].mxu0
    %v1785 = vadd.f32 0.0, %v1784
    %v1786 = vpop.f32.mrb[0].mxu0
    %v1787 = vpop.f32.mrb[0].mxu0
    %v1788 = vadd.f32 0.0, %v1787
    %v1789 = vpop.f32.mrb[0].mxu0
    %1790 = vdwg.mxu0
    %1792 = vrot.lane.b32.xlu0 %v1590, 104
    %v1793 = vpop.permute.xlu0 %1792
    %v1795 = vsel %vm185, %v1793, 0
    %v1798 = vsel %vm263, %v1740, 0
    %1800 = vmatprep.subr.bf16.mxu0 0
    %1801 = vmatpush1.bf16.msra.mxu0 %v1798
    %1802 = vmatprep.subr.bf16.mxu0 0
    %1803 = vmatpush1.bf16.msra.mxu0 0
    %1804 = vmatprep.subr.bf16.mxu0 0
    %1805 = vmatpush1.bf16.msra.mxu0 0
    %1806 = vmatprep.subr.bf16.mxu0 0
    %1807 = vmatpush1.bf16.msra.mxu0 0
    %1808 = vmatprep.subr.bf16.mxu0 0
    %1809 = vmatpush1.bf16.msra.mxu0 0
    %1810 = vmatprep.subr.bf16.mxu0 0
    %1811 = vmatpush1.bf16.msra.mxu0 0
    %1812 = vmatprep.subr.bf16.mxu0 0
    %1813 = vmatpush1.bf16.msra.mxu0 0
    %1814 = vmatprep.subr.bf16.mxu0 0
    %1815 = vmatpush1.bf16.msra.mxu0 0
    %1816 = vmatprep.subr.bf16.mxu0 0
    %1817 = vmatpush1.bf16.msra.mxu0 0
    %1818 = vmatprep.subr.bf16.mxu0 0
    %1819 = vmatpush1.bf16.msra.mxu0 0
    %1820 = vmatprep.subr.bf16.mxu0 0
    %1821 = vmatpush1.bf16.msra.mxu0 0
    %1822 = vmatprep.subr.bf16.mxu0 0
    %1823 = vmatpush1.bf16.msra.mxu0 0
    %1824 = vmatprep.subr.bf16.mxu0 0
    %1825 = vmatpush1.bf16.msra.mxu0 0
    %1826 = vmatprep.subr.bf16.mxu0 0
    %1827 = vmatpush1.bf16.msra.mxu0 0
    %1828 = vmatprep.subr.bf16.mxu0 0
    %1829 = vmatpush1.bf16.msra.mxu0 0
    %1830 = vmatprep.subr.bf16.mxu0 0
    %1831 = vmatpush1.bf16.msra.mxu0 0
    %1832 = vmatprep.mubr.bf16.mxu0 0
    %1833 = vmatmul.mubr.bf16.gmra.mrb[0].mxu0 %v1795
    %v1834 = vpop.f32.mrb[0].mxu0
    %v1835 = vadd.f32 0.0, %v1834
    %v1836 = vpop.f32.mrb[0].mxu0
    %v1837 = vpop.f32.mrb[0].mxu0
    %v1838 = vadd.f32 0.0, %v1837
    %v1839 = vpop.f32.mrb[0].mxu0
    %1840 = vdwg.mxu0
    %v1841 = vsel %vm475, %v1785, -inf
    %1842 = vmax.xlane.f32.xlu0 %v1841
    %v1843 = vpop.xlane.xlu0 %1842
    %v1844 = vsel %vm475, %v1788, -inf
    %1845 = vmax.xlane.f32.xlu0 %v1844
    %v1846 = vpop.xlane.xlu0 %1845
    %v1847 = vsel %vm475, %v1835, -inf
    %1848 = vmax.xlane.f32.xlu0 %v1847
    %v1849 = vpop.xlane.xlu0 %1848
    %v1850 = vsel %vm475, %v1838, -inf
    %1851 = vmax.xlane.f32.xlu0 %v1850
    %v1852 = vpop.xlane.xlu0 %1851
    %v1853 = vsub.f32 %v1785, %v1843
    %v1854 = vsub.f32 %v1788, %v1846
    %v1855 = vsub.f32 %v1835, %v1849
    %v1856 = vsub.f32 %v1838, %v1852
    %v1857 = vmul.f32 %v1853, 1.442695
    %v1858 = vpow.pop %v1857
    %v1859 = vmul.f32 %v1854, 1.442695
    %v1860 = vpow.pop %v1859
    %v1861 = vmul.f32 %v1855, 1.442695
    %v1862 = vpow.pop %v1861
    %v1863 = vmul.f32 %v1856, 1.442695
    %v1864 = vpow.pop %v1863
    %v1865 = vsel %vm475, %v1858, 0.0
    %1866 = vadd.xlane.f32.xlu0 %v1865
    %v1867 = vpop.xlane.xlu0 %1866
    %v1868 = vsel %vm475, %v1860, 0.0
    %1869 = vadd.xlane.f32.xlu0 %v1868
    %v1870 = vpop.xlane.xlu0 %1869
    %v1871 = vsel %vm475, %v1862, 0.0
    %1872 = vadd.xlane.f32.xlu0 %v1871
    %v1873 = vpop.xlane.xlu0 %1872
    %v1874 = vsel %vm475, %v1864, 0.0
    %1875 = vadd.xlane.f32.xlu0 %v1874
    %v1876 = vpop.xlane.xlu0 %1875
    %v1877 = vrcp.pop %v1867
    %v1878 = vmul.f32 %v1858, %v1877
    %v1879 = vrcp.pop %v1870
    %v1880 = vmul.f32 %v1860, %v1879
    %v1881 = vrcp.pop %v1873
    %v1882 = vmul.f32 %v1862, %v1881
    %v1883 = vrcp.pop %v1876
    %v1884 = vmul.f32 %v1864, %v1883
    %s1885 = scalar_lea.vmem [#allocation12], 48
    %1886 = vst.msk [vmem:[%s1885] sm:$0xff] %vm475, %v1878
    %1887 = vst.msk [vmem:[%s1885 + $0x8] sm:$0xff] %vm475, %v1880
    %1888 = vst.msk [vmem:[%s1885 + $0x40] sm:$0xff] %vm475, %v1882
    %1889 = vst.msk [vmem:[%s1885 + $0x48] sm:$0xff] %vm475, %v1884
    %v1890 = vpack.c.bf16 %v1880, %v1878
    %v1891 = vpack.c.bf16 %v1884, %v1882
    %v1894 = vsel %vm475, %v1890, 0
    %1896 = vmatprep.subr.bf16.mxu0 0
    %1897 = vmatpush1.bf16.msra.mxu0 %v1743
    %1898 = vmatprep.subr.bf16.mxu0 0
    %1899 = vmatpush1.bf16.msra.mxu0 0
    %1900 = vmatprep.subr.bf16.mxu0 0
    %1901 = vmatpush1.bf16.msra.mxu0 0
    %1902 = vmatprep.subr.bf16.mxu0 0
    %1903 = vmatpush1.bf16.msra.mxu0 0
    %1904 = vmatprep.subr.bf16.mxu0 0
    %1905 = vmatpush1.bf16.msra.mxu0 0
    %1906 = vmatprep.subr.bf16.mxu0 0
    %1907 = vmatpush1.bf16.msra.mxu0 0
    %1908 = vmatprep.subr.bf16.mxu0 0
    %1909 = vmatpush1.bf16.msra.mxu0 0
    %1910 = vmatprep.subr.bf16.mxu0 0
    %1911 = vmatpush1.bf16.msra.mxu0 0
    %1912 = vmatprep.subr.bf16.mxu0 0
    %1913 = vmatpush1.bf16.msra.mxu0 0
    %1914 = vmatprep.subr.bf16.mxu0 0
    %1915 = vmatpush1.bf16.msra.mxu0 0
    %1916 = vmatprep.subr.bf16.mxu0 0
    %1917 = vmatpush1.bf16.msra.mxu0 0
    %1918 = vmatprep.subr.bf16.mxu0 0
    %1919 = vmatpush1.bf16.msra.mxu0 0
    %1920 = vmatprep.subr.bf16.mxu0 0
    %1921 = vmatpush1.bf16.msra.mxu0 0
    %1922 = vmatprep.subr.bf16.mxu0 0
    %1923 = vmatpush1.bf16.msra.mxu0 0
    %1924 = vmatprep.subr.bf16.mxu0 0
    %1925 = vmatpush1.bf16.msra.mxu0 0
    %1926 = vmatprep.subr.bf16.mxu0 0
    %1927 = vmatpush1.bf16.msra.mxu0 0
    %1928 = vmatprep.mubr.bf16.mxu0 0
    %1929 = vmatmul.mubr.bf16.gmra.mrb[0].mxu0 %v1894
    %v1930 = vpop.f32.mrb[0].mxu0
    %v1931 = vadd.f32 0.0, %v1930
    %v1932 = vpop.f32.mrb[0].mxu0
    %v1933 = vpop.f32.mrb[0].mxu0
    %v1934 = vadd.f32 0.0, %v1933
    %v1935 = vpop.f32.mrb[0].mxu0
    %1936 = vdwg.mxu0
    %v1939 = vsel %vm475, %v1891, 0
    %1941 = vmatprep.subr.bf16.mxu0 0
    %1942 = vmatpush1.bf16.msra.mxu0 %v1793
    %1943 = vmatprep.subr.bf16.mxu0 0
    %1944 = vmatpush1.bf16.msra.mxu0 0
    %1945 = vmatprep.subr.bf16.mxu0 0
    %1946 = vmatpush1.bf16.msra.mxu0 0
    %1947 = vmatprep.subr.bf16.mxu0 0
    %1948 = vmatpush1.bf16.msra.mxu0 0
    %1949 = vmatprep.subr.bf16.mxu0 0
    %1950 = vmatpush1.bf16.msra.mxu0 0
    %1951 = vmatprep.subr.bf16.mxu0 0
    %1952 = vmatpush1.bf16.msra.mxu0 0
    %1953 = vmatprep.subr.bf16.mxu0 0
    %1954 = vmatpush1.bf16.msra.mxu0 0
    %1955 = vmatprep.subr.bf16.mxu0 0
    %1956 = vmatpush1.bf16.msra.mxu0 0
    %1957 = vmatprep.subr.bf16.mxu0 0
    %1958 = vmatpush1.bf16.msra.mxu0 0
    %1959 = vmatprep.subr.bf16.mxu0 0
    %1960 = vmatpush1.bf16.msra.mxu0 0
    %1961 = vmatprep.subr.bf16.mxu0 0
    %1962 = vmatpush1.bf16.msra.mxu0 0
    %1963 = vmatprep.subr.bf16.mxu0 0
    %1964 = vmatpush1.bf16.msra.mxu0 0
    %1965 = vmatprep.subr.bf16.mxu0 0
    %1966 = vmatpush1.bf16.msra.mxu0 0
    %1967 = vmatprep.subr.bf16.mxu0 0
    %1968 = vmatpush1.bf16.msra.mxu0 0
    %1969 = vmatprep.subr.bf16.mxu0 0
    %1970 = vmatpush1.bf16.msra.mxu0 0
    %1971 = vmatprep.subr.bf16.mxu0 0
    %1972 = vmatpush1.bf16.msra.mxu0 0
    %1973 = vmatprep.mubr.bf16.mxu0 0
    %1974 = vmatmul.mubr.bf16.gmra.mrb[0].mxu0 %v1939
    %v1975 = vpop.f32.mrb[0].mxu0
    %v1976 = vadd.f32 0.0, %v1975
    %v1977 = vpop.f32.mrb[0].mxu0
    %v1978 = vpop.f32.mrb[0].mxu0
    %v1979 = vadd.f32 0.0, %v1978
    %v1980 = vpop.f32.mrb[0].mxu0
    %1981 = vdwg.mxu0
    %v1982 = vpack.c.bf16 %v1934, %v1931
    %v1983 = vpack.c.bf16 %v1979, %v1976
    %1986 = vrot.lane.b32.xlu0 %v1070, 8
    %v1987 = vpop.permute.xlu0 %1986
    %1988 = vrot.lane.b32.xlu0 %v1071, 8
    %v1989 = vpop.permute.xlu0 %1988
    %1992 = vrot.lane.b32.xlu0 %v1526, 16
    %v1993 = vpop.permute.xlu0 %1992
    %1994 = vrot.lane.b32.xlu0 %v1527, 16
    %v1995 = vpop.permute.xlu0 %1994
    %1998 = vrot.lane.b32.xlu0 %v1982, 24
    %v1999 = vpop.permute.xlu0 %1998
    %2000 = vrot.lane.b32.xlu0 %v1983, 24
    %v2001 = vpop.permute.xlu0 %2000
    %v2004 = vsel %vm185, %v614, %v1987
    %v2007 = vsel %vm185, %v615, %v1989
    %v2009 = vsel %vm475, %v2004, %v1993
    %v2011 = vsel %vm475, %v2007, %v1995
    %vm2012 = vcmask 195584
    %v2014 = vsel %vm2012, %v2009, %v1999
    %v2016 = vsel %vm2012, %v2011, %v2001
    %v2017 = vld [vmem:[#allocation2] sm:$0xff]
    %v2018 = vld [vmem:[#allocation2 + $0x8] sm:$0xff]
    %v2019 = vld [vmem:[#allocation2 + $0x10] sm:$0xff]
    %v2020 = vld [vmem:[#allocation2 + $0x18] sm:$0xff]
    %v2021 = vld [vmem:[#allocation9] sm:$0xf]
    %v2022 = vld [vmem:[#allocation9 + $0x4] sm:$0xf]
    %v2023 = vld [vmem:[#allocation9 + $0x8] sm:$0xf]
    %v2024 = vld [vmem:[#allocation9 + $0xc] sm:$0xf]
    %v2029 = vunpack.c.l.b16 %v2021
    %v2030 = vunpack.c.l.b16 %v2022
    %v2031 = vunpack.c.l.b16 %v2023
    %v2032 = vunpack.c.l.b16 %v2024
    %v2033 = vpack.c.b16 %v2030, %v2029
    %v2034 = vpack.c.b16 %v2032, %v2031
    %v2037 = vsel %vm129, %v2014, 0
    %v2039 = vsel %vm129, %v2016, 0
    %2041 = vmatprep.subr.bf16.mxu0 0
    %2042 = vmatpush1.bf16.msra.mxu0 %v2033
    %2043 = vmatprep.subr.bf16.mxu0 0
    %2044 = vmatpush1.bf16.msra.mxu0 %v2034
    %2045 = vmatprep.subr.bf16.mxu0 0
    %2046 = vmatpush1.bf16.msra.mxu0 0
    %2047 = vmatprep.subr.bf16.mxu0 0
    %2048 = vmatpush1.bf16.msra.mxu0 0
    %2049 = vmatprep.subr.bf16.mxu0 0
    %2050 = vmatpush1.bf16.msra.mxu0 0
    %2051 = vmatprep.subr.bf16.mxu0 0
    %2052 = vmatpush1.bf16.msra.mxu0 0
    %2053 = vmatprep.subr.bf16.mxu0 0
    %2054 = vmatpush1.bf16.msra.mxu0 0
    %2055 = vmatprep.subr.bf16.mxu0 0
    %2056 = vmatpush1.bf16.msra.mxu0 0
    %2057 = vmatprep.subr.bf16.mxu0 0
    %2058 = vmatpush1.bf16.msra.mxu0 0
    %2059 = vmatprep.subr.bf16.mxu0 0
    %2060 = vmatpush1.bf16.msra.mxu0 0
    %2061 = vmatprep.subr.bf16.mxu0 0
    %2062 = vmatpush1.bf16.msra.mxu0 0
    %2063 = vmatprep.subr.bf16.mxu0 0
    %2064 = vmatpush1.bf16.msra.mxu0 0
    %2065 = vmatprep.subr.bf16.mxu0 0
    %2066 = vmatpush1.bf16.msra.mxu0 0
    %2067 = vmatprep.subr.bf16.mxu0 0
    %2068 = vmatpush1.bf16.msra.mxu0 0
    %2069 = vmatprep.subr.bf16.mxu0 0
    %2070 = vmatpush1.bf16.msra.mxu0 0
    %2071 = vmatprep.subr.bf16.mxu0 0
    %2072 = vmatpush1.bf16.msra.mxu0 0
    %2073 = vmatprep.mubr.bf16.mxu0 0
    %2074 = vmatmul.mubr.bf16.gmra.mrb[0].mxu0 %v2037
    %v2075 = vpop.f32.mrb[0].mxu0
    %v2076 = vadd.f32 0.0, %v2075
    %v2077 = vpop.f32.mrb[0].mxu0
    %v2078 = vpop.f32.mrb[0].mxu0
    %v2079 = vadd.f32 0.0, %v2078
    %v2080 = vpop.f32.mrb[0].mxu0
    %2081 = vmatprep.mubr.bf16.mxu0 0
    %2082 = vmatmul.mubr.bf16.gmra.mrb[0].mxu0 %v2039
    %v2083 = vpop.f32.mrb[0].mxu0
    %v2084 = vadd.f32 0.0, %v2083
    %v2085 = vpop.f32.mrb[0].mxu0
    %v2086 = vpop.f32.mrb[0].mxu0
    %v2087 = vadd.f32 0.0, %v2086
    %v2088 = vpop.f32.mrb[0].mxu0
    %2089 = vdwg.mxu0
    %v2090 = vadd.f32 %v2017, %v2076
    %v2091 = vadd.f32 %v2018, %v2079
    %v2092 = vadd.f32 %v2019, %v2084
    %v2093 = vadd.f32 %v2020, %v2087
    %2094 = vst.msk [vmem:[#allocation2] sm:$0xff] %vm129, %v2090
    %2095 = vst.msk [vmem:[#allocation2 + $0x8] sm:$0xff] %vm129, %v2091
    %2096 = vst.msk [vmem:[#allocation2 + $0x10] sm:$0xff] %vm129, %v2092
    %2097 = vst.msk [vmem:[#allocation2 + $0x18] sm:$0xff] %vm129, %v2093
    // Predicated region
    $region46: #{tpu_custom_call.1} parent=1 // pred_check
      %p2098 = pneg %p83
    $region47: #{tpu_custom_call.1} parent=1 // pred_check_branch
      %2100 = sbr.rel (%p2098) target = $region49
    $region48: #{tpu_custom_call.1} parent=1 // pred_region
      %v2101 = vld [vmem:[#allocation2] sm:$0xff]
      %v2102 = vld [vmem:[#allocation2 + $0x8] sm:$0xff]
      %v2103 = vld [vmem:[#allocation2 + $0x10] sm:$0xff]
      %v2104 = vld [vmem:[#allocation2 + $0x18] sm:$0xff]
      %v2105 = vld [vmem:[%s5] sm:$0x1]
      %v2107 = vlaneseq
      %v2108 = vshrl.u32 %v2107, 7
      %v2109 = vsub.s32 0, %v2108
      %v2110 = vrot.slane %v2105, %v2109
      %v2112 = vadd.f32 %v2101, %v2110
      %v2113 = vadd.f32 %v2102, %v2110
      %v2114 = vadd.f32 %v2103, %v2110
      %v2115 = vadd.f32 %v2104, %v2110
      %2116 = vst.msk [vmem:[#allocation11] sm:$0xff] %vm129, %v2112
      %2117 = vst.msk [vmem:[#allocation11 + $0x8] sm:$0xff] %vm129, %v2113
      %2118 = vst.msk [vmem:[#allocation11 + $0x10] sm:$0xff] %vm129, %v2114
      %2119 = vst.msk [vmem:[#allocation11 + $0x18] sm:$0xff] %vm129, %v2115
    $region49: #{tpu_custom_call.1} parent=1 // pred_fallthru
      _
    // Predicated region
    $region50: #{tpu_custom_call.1} parent=1 // pred_check
      _
    $region51: #{tpu_custom_call.1} parent=1 // pred_check_branch
      %2121 = sbr.rel (0) target = $region53
    $region52: #{tpu_custom_call.1} parent=1 // pred_region
      %s2123 = ssub.s32 512, 512
      %2124 = vsyncadd [#allocation5], %s2123
      %s2125 = sshll.u32 [#allocation11], 4
      %s2126 = int_to_ptr.vmem [resolvable:$true] %s2125
      %2131 = dma.vmem_to_hbm [thread:$0]  %s2126, 512, %s6, [#allocation5], 128, 128, 8
    $region53: #{tpu_custom_call.1} parent=1 // pred_fallthru
      _
    // Predicated region
    $region54: #{tpu_custom_call.1} parent=1 // pred_check
      _
    $region55: #{tpu_custom_call.1} parent=1 // pred_check_branch
      %2133 = sbr.rel (0) target = $region57
    $region56: #{tpu_custom_call.1} parent=1 // pred_region
      %s2135 = ssub.s32 2048, 2048
      %2136 = vsyncadd [#allocation13], %s2135
      %s2137 = sshll.u32 [#allocation12], 4
      %s2138 = int_to_ptr.vmem [resolvable:$true] %s2137
      %2143 = dma.vmem_to_hbm [thread:$0]  %s2138, 2048, %s7, [#allocation13], 128, 128, 8
    $region57: #{tpu_custom_call.1} parent=1 // pred_fallthru
      _
    // Predicated region
    $region58: #{tpu_custom_call.1} parent=1 // pred_check
      _
    $region59: #{tpu_custom_call.1} parent=1 // pred_check_branch
      %2145 = sbr.rel (0) target = $region61
    $region60: #{tpu_custom_call.1} parent=1 // pred_region
      %2146 = dma.done [#allocation5], 512
    $region61: #{tpu_custom_call.1} parent=1 // pred_fallthru
      _
    // Predicated region
    $region62: #{tpu_custom_call.1} parent=1 // pred_check
      _
    $region63: #{tpu_custom_call.1} parent=1 // pred_check_branch
      %2148 = sbr.rel (0) target = $region65
    $region64: #{tpu_custom_call.1} parent=1 // pred_region
      %2149 = dma.done [#allocation13], 2048
    $region65: #{tpu_custom_call.1} parent=1 // pred_fallthru
      _
    %2150 = vsyncpa [#allocation4], 1
    %2151 = vsyncpa [#allocation7], 1
    %2152 = vsyncpa [#allocation10], 1
    %2153 = vsyncpa [#allocation5], 1
    %2154 = vsyncpa [#allocation13], 1

</llo_original>
